<compile_context>
chip_gen: v7x
topology: tpu7x:2x2x1
jax: 0.10.0
libtpu: 0.0.40
codegen_flags: <defaults>
</compile_context>

<pallas_src>
import math
import functools

import numpy as np
import jax
import jax.numpy as jnp
from jax.experimental import pallas as pl
from jax.experimental.pallas import tpu as pltpu


# ----------------------------------------------------------------------------
# Fused Pallas kernel: IGConv -> IGConv -> MaxPoolCmplx(2,2) -> CReLU
# ----------------------------------------------------------------------------
def _double_igconv_kernel(x_ref, w1_ref, w2_ref, sel_ref, o_ref, act1_ref, *,
                          NB, H, W, K, P, Ci2, Cm2, Co2):
    """Processes NB batch elements per grid step.

    x_ref   : (NB, H+2P, W*Ci2)       bf16  vertically zero-padded input,
                                            lanes = (x, [re|im] channels)
    w1_ref  : (K, W*Ci2, W*Cm2)       bf16  banded conv1 weights (one per dy)
    w2_ref  : (K, W*Cm2, W*Co2)       bf16  banded conv2 weights, columns
                                            pre-permuted to the pooled layout
    sel_ref : (2, NB*H/2, NB*H)       f32   constant even/odd row selectors
    o_ref   : (NB, 2, H/2, (W/2)*Cout) f32  output, axis 1 = [re, im]
    act1_ref: (NB, H+2P, W*Cm2)       bf16  VMEM: conv1 act with vertical halo
    """
    H2, W2 = H // 2, W // 2
    Cout = Co2 // 2
    Q = W2 * Cout

    # Zero act1's vertical halo rows once: the scratch persists across grid
    # steps, the interior is fully overwritten every step, the halo never is.
    @pl.when(pl.program_id(0) == 0)
    def _():
        act1_ref[...] = jnp.zeros(act1_ref.shape, act1_ref.dtype)

    def band_conv(slab, w_ref):
        # One matmul per kernel row dy; dx taps and horizontal "same" padding
        # are folded into the banded weight, so the contraction depth is
        # W*Cin2 and the activations stay in the lane-dense (rows, W*C)
        # layout end to end (single f32 accumulation chain -> MRB friendly).
        acc = jnp.dot(slab(0), w_ref[0], preferred_element_type=jnp.float32)
        for dy in range(1, K):
            acc = acc + jnp.dot(slab(dy), w_ref[dy],
                                preferred_element_type=jnp.float32)
        return acc                                    # (NB*H, W*Cout2) f32

    # ---- IGConv #1 ----------------------------------------------------------
    def x_slab(dy):
        return x_ref[:, dy:dy + H, :].reshape(NB * H, W * Ci2)

    a1 = band_conv(x_slab, w1_ref)                    # (NB*H, W*Cm2) f32

    # Stash conv1's activation (bf16) between the zeroed vertical halo rows.
    act1_ref[:, P:P + H, :] = a1.reshape(NB, H, W * Cm2).astype(jnp.bfloat16)

    # ---- IGConv #2 ----------------------------------------------------------
    def a_slab(dy):
        return act1_ref[:, dy:dy + H, :].reshape(NB * H, W * Cm2)

    a2 = band_conv(a_slab, w2_ref)                    # (NB*H, W*Co2) f32
    # conv2's banded weight already emits columns grouped for the 2x2 pool:
    #   [ re, x even | re, x odd | im, x even | im, x odd ], each Q lanes wide.
    re0, re1 = a2[:, 0 * Q:1 * Q], a2[:, 1 * Q:2 * Q]
    im0, im1 = a2[:, 2 * Q:3 * Q], a2[:, 3 * Q:4 * Q]

    # ---- MaxPoolCmplx(2,2) by |z| (ties -> first) + ReLUCmplx (CReLU) -------
    # horizontal winner (x even vs x odd): pure element-wise, no lane shuffles
    m0 = re0 * re0 + im0 * im0
    m1 = re1 * re1 + im1 * im1
    th = m1 > m0
    hr = jnp.where(th, re1, re0)                      # (NB*H, Q)
    hi = jnp.where(th, im1, im0)

    # vertical winner (y even vs y odd): compact rows with constant 0/1
    # selection matmuls (avoids strided sublane gathers / odd reshapes).
    sel_top = sel_ref[0]                              # (NB*H2, NB*H)
    sel_bot = sel_ref[1]
    tr = jnp.dot(sel_top, hr, preferred_element_type=jnp.float32)
    ti = jnp.dot(sel_top, hi, preferred_element_type=jnp.float32)
    br = jnp.dot(sel_bot, hr, preferred_element_type=jnp.float32)
    bi = jnp.dot(sel_bot, hi, preferred_element_type=jnp.float32)
    tv = (br * br + bi * bi) > (tr * tr + ti * ti)
    pr = jnp.maximum(jnp.where(tv, br, tr), 0.0)      # (NB*H2, Q)
    pi = jnp.maximum(jnp.where(tv, bi, ti), 0.0)

    for b in range(NB):                               # static, tiny unroll
        o_ref[b, 0] = pr[b * H2:(b + 1) * H2]
        o_ref[b, 1] = pi[b * H2:(b + 1) * H2]


# ----------------------------------------------------------------------------
# Parameters: Gabor bank, base weights, block-complex weight layout
# ----------------------------------------------------------------------------
def gabor_bank(no_g, k):
    """Deterministic bank of no_g complex Gabor filters of size (k, k)."""
    half = (k - 1) / 2.0
    yy, xx = jnp.meshgrid(jnp.arange(k, dtype=jnp.float32) - half,
                          jnp.arange(k, dtype=jnp.float32) - half,
                          indexing="ij")
    sigma = math.pi
    lam = float(k)
    g_r, g_i = [], []
    for g in range(no_g):
        theta = g * math.pi / no_g
        x_rot = xx * math.cos(theta) + yy * math.sin(theta)
        y_rot = -xx * math.sin(theta) + yy * math.cos(theta)
        env = jnp.exp(-(x_rot ** 2 + y_rot ** 2) / (2.0 * sigma ** 2))
        phase = 2.0 * math.pi * x_rot / lam
        g_r.append(env * jnp.cos(phase))
        g_i.append(env * jnp.sin(phase))
    return jnp.stack(g_r), jnp.stack(g_i)            # each (no_g, k, k)


def _block_weights(wr, wi):
    """(Cout, Cin, K, K) complex filter -> (K*K, 2*Cin, 2*Cout) bf16 block form.

    Tap-major (dy, dx); rows = [xr | xi] input features, cols = [or | oi]
    output features, i.e. W_t = [[wr_t^T, wi_t^T], [-wi_t^T, wr_t^T]].
    Cross-correlation orientation, matching nn.Conv2d.
    """
    cout, cin, k, _ = wr.shape
    wr_t = jnp.transpose(wr, (2, 3, 1, 0)).reshape(k * k, cin, cout)
    wi_t = jnp.transpose(wi, (2, 3, 1, 0)).reshape(k * k, cin, cout)
    top = jnp.concatenate([wr_t, wi_t], axis=-1)      # xr rows -> [or | oi]
    bot = jnp.concatenate([-wi_t, wr_t], axis=-1)     # xi rows -> [or | oi]
    return jnp.concatenate([top, bot], axis=1).astype(jnp.bfloat16)


def init_params(key, in_c, out_c, k, no_g):
    """Deterministic weights for the two IGConv layers of DoubleIGConv."""
    gr, gi = gabor_bank(no_g, k)

    def make(wkey, cin, cout):
        base = cout // no_g
        std = math.sqrt(2.0 / (cin * k * k))
        w = jax.random.normal(wkey, (base, cin, k, k), jnp.float32) * std
        wr = (w[None] * gr[:, None, None]).reshape(cout, cin, k, k)
        wi = (w[None] * gi[:, None, None]).reshape(cout, cin, k, k)
        return _block_weights(wr, wi)

    k1, k2 = jax.random.split(key)
    return dict(w1=make(k1, in_c, out_c), w2=make(k2, out_c, out_c))


# ----------------------------------------------------------------------------
# Banded weights: fold dx taps + horizontal "same" padding into the matmul
# ----------------------------------------------------------------------------
def _banded_weights(block_w, width, k, p):
    """(K*K, Cin2, Cout2) tap-major blocks -> (K, width*Cin2, width*Cout2).

    Row block w_in feeds output column x iff dx = w_in - x + p is in [0, K);
    columns falling outside [0, width) (the horizontal padding) simply have no
    rows, so they contribute zero.  Vertical padding stays physical (zero rows
    in the activation storage).
    """
    kk, cin2, cout2 = block_w.shape
    sel = np.zeros((k, width, width), np.float32)     # sel[dx, w_in, x_out]
    for dx in range(k):
        for x in range(width):
            w_in = x + dx - p
            if 0 <= w_in < width:
                sel[dx, w_in, x] = 1.0
    bw = block_w.astype(jnp.float32).reshape(k, k, cin2, cout2)
    band = jnp.einsum("dwx,kdio->kwixo", jnp.asarray(sel), bw)
    return band.reshape(k, width * cin2, width * cout2).astype(jnp.bfloat16)


def _pool_column_perm(width, cout2):
    """Column permutation putting conv2 outputs in pooled order:
    [re, x even | re, x odd | im, x even | im, x odd], each (width/2)*Cout."""
    cout = cout2 // 2
    w2 = width // 2
    perm = np.zeros(width * cout2, np.int32)
    for x in range(width):
        x2, px = divmod(x, 2)
        for ri in range(2):
            for c in range(cout):
                old = x * cout2 + ri * cout + c
                new = ((ri * 2 + px) * w2 + x2) * cout + c
                perm[new] = old
    return jnp.asarray(perm)


# ----------------------------------------------------------------------------
# Forward wrapper
# ----------------------------------------------------------------------------
def double_igconv_forward(x, params, kernel_size):
    """DoubleIGConv.forward.

    x: (2, N, Cin, H, W) complex-stacked NCHW.
    Returns (2, N, Cout, H//2, W//2).
    """
    k = kernel_size
    p = k // 2

    xr = jnp.transpose(x[0], (0, 2, 3, 1))            # NCHW -> NHWC
    xi = jnp.transpose(x[1], (0, 2, 3, 1))
    xc = jnp.concatenate([xr, xi], axis=-1)           # (N, H, W, Ci2)
    n, h, wd, ci2 = xc.shape
    assert h % 2 == 0 and wd % 2 == 0, (h, wd)
    hp = h + 2 * p
    h2, wd2 = h // 2, wd // 2

    # (N, Hp, W*Ci2) bf16: channels packed into the lane axis; vertical-only
    # zero padding (horizontal padding is folded into the banded weights).
    # TODO(synk): for large inputs fold this transpose/pad/concat into the
    #             kernel (DMA raw planes into a zeroed VMEM scratch).
    xl = jnp.pad(xc.reshape(n, h, wd * ci2), ((0, 0), (p, p), (0, 0)))
    xl = xl.astype(jnp.bfloat16)

    w1b = _banded_weights(params["w1"], wd, k, p)     # (K, W*Ci2, W*Cm2)
    w2b = _banded_weights(params["w2"], wd, k, p)     # (K, W*Cm2, W*Co2)
    cm2 = w1b.shape[-1] // wd
    co2 = w2b.shape[-1] // wd
    cout = co2 // 2
    w2b = w2b[:, :, _pool_column_perm(wd, co2)]       # pooled output layout

    # Batch blocking: biggest divisor of N up to 8 images per grid step so the
    # matmul M (= NB*H rows) grows and per-step overhead amortizes.
    # TODO(synk): for large N on v7x prefer an even grid length so the
    #             "parallel" axis splits across both TensorCores.
    nb = max(d for d in range(1, min(n, 8) + 1) if n % d == 0)

    # Constant even/odd row selectors for the vertical half of the 2x2 pool.
    psel = np.zeros((2, nb * h2, nb * h), np.float32)
    for b in range(nb):
        for y2 in range(h2):
            psel[0, b * h2 + y2, b * h + 2 * y2] = 1.0
            psel[1, b * h2 + y2, b * h + 2 * y2 + 1] = 1.0
    psel = jnp.asarray(psel)

    kernel = functools.partial(
        _double_igconv_kernel,
        NB=nb, H=h, W=wd, K=k, P=p, Ci2=ci2, Cm2=cm2, Co2=co2)

    y = pl.pallas_call(
        kernel,
        out_shape=jax.ShapeDtypeStruct((n, 2, h2, wd2 * cout), jnp.float32),
        grid_spec=pltpu.PrefetchScalarGridSpec(
            num_scalar_prefetch=0,
            grid=(n // nb,),
            in_specs=[
                # NB padded images per step
                pl.BlockSpec((nb, hp, wd * ci2), lambda b: (b, 0, 0)),
                # weights / selectors stay resident across the grid
                pl.BlockSpec((k, wd * ci2, wd * cm2), lambda b: (0, 0, 0)),
                pl.BlockSpec((k, wd * cm2, wd * co2), lambda b: (0, 0, 0)),
                pl.BlockSpec((2, nb * h2, nb * h), lambda b: (0, 0, 0)),
            ],
            out_specs=pl.BlockSpec((nb, 2, h2, wd2 * cout),
                                   lambda b: (b, 0, 0, 0)),
            scratch_shapes=[
                pltpu.VMEM((nb, hp, wd * cm2), jnp.bfloat16),
            ]),
        compiler_params=pltpu.CompilerParams(
            dimension_semantics=("parallel",)),
    )(xl, w1b, w2b, psel)

    # (N, 2, H2, W2*Cout) -> (2, N, Cout, H2, W2)   (cheap wrapper plumbing)
    y = y.reshape(n, 2, h2, wd2, cout)
    return jnp.transpose(y, (1, 0, 4, 2, 3))


# ----------------------------------------------------------------------------
# Demo
# ----------------------------------------------------------------------------
if __name__ == "__main__":
    key = jax.random.PRNGKey(0)
    kx, kp = jax.random.split(key)

    # DoubleIGConv(in_channels=4, out_channels=8, kernel_size=3,
    #              pooling='max', no_g=4, gabor_pooling=None, first=False)
    N, C_IN, H, W = 2, 4, 16, 16
    C_OUT, K, NO_G = 8, 3, 4

    x = jax.random.normal(kx, (2, N, C_IN, H, W), jnp.float32)
    params = init_params(kp, C_IN, C_OUT, K, NO_G)

    fwd = jax.jit(functools.partial(double_igconv_forward, kernel_size=K))
    y = fwd(x, params)
    y = jax.block_until_ready(y)

    assert y.shape == (2, N, C_OUT, H // 2, W // 2), y.shape
    assert bool(jnp.all(jnp.isfinite(y)))
    print("KERNEL_OK")
</pallas_src>

<mosaic_0001>
module attributes {stable_mosaic.version = 11 : i64} {
  func.func @_double_igconv_kernel(%arg0: i32, %arg1: memref<2x18x128xbf16, #tpu.memory_space<vmem>>, %arg2: memref<3x128x256xbf16, #tpu.memory_space<vmem>>, %arg3: memref<3x256x256xbf16, #tpu.memory_space<vmem>>, %arg4: memref<2x16x32xf32, #tpu.memory_space<vmem>>, %arg5: memref<2x2x8x64xf32, #tpu.memory_space<vmem>>, %arg6: memref<2x18x256xbf16, #tpu.memory_space<vmem>>) attributes {dimension_semantics = [#tpu.dimension_semantics<parallel>], iteration_bounds = array<i64: 1>, scalar_prefetch = 0 : i64, scratch_operands = 1 : i64, tpu.core_type = #tpu.core_type<tc>, window_params = [{transform_indices = @transform_0, window_bounds = array<i64: 2, 18, 128>}, {pipeline_mode = #tpu.pipeline_mode<synchronous>, transform_indices = @transform_1, window_bounds = array<i64: 3, 128, 256>}, {pipeline_mode = #tpu.pipeline_mode<synchronous>, transform_indices = @transform_2, window_bounds = array<i64: 3, 256, 256>}, {pipeline_mode = #tpu.pipeline_mode<synchronous>, transform_indices = @transform_3, window_bounds = array<i64: 2, 16, 32>}, {transform_indices = @transform_4, window_bounds = array<i64: 2, 2, 8, 64>}]} {
    %c0_i32 = arith.constant 0 : i32
    %0 = arith.cmpi eq, %arg0, %c0_i32 : i32
    %1 = arith.extui %0 : i1 to i32
    %c0_i32_0 = arith.constant 0 : i32
    %2 = arith.cmpi ne, %1, %c0_i32_0 : i32
    scf.if %2 {
      %cst_70 = arith.constant 0.000000e+00 : bf16
      %90 = vector.broadcast %cst_70 : bf16 to vector<2x18x256xbf16>
      %c0_71 = arith.constant 0 : index
      %c0_72 = arith.constant 0 : index
      %c0_73 = arith.constant 0 : index
      %91 = vector.load %arg6[%c0_71, %c0_72, %c0_73] : memref<2x18x256xbf16, #tpu.memory_space<vmem>>, vector<2x18x256xbf16>
      tpu.vector_store %arg6[%c0_71, %c0_72, %c0_73], %90 {strides = array<i32>} : memref<2x18x256xbf16, #tpu.memory_space<vmem>>, vector<2x18x256xbf16>,
    } else {
    }
    %c0 = arith.constant 0 : index
    %c0_1 = arith.constant 0 : index
    %c0_2 = arith.constant 0 : index
    %3 = vector.load %arg1[%c0, %c0_1, %c0_2] : memref<2x18x128xbf16, #tpu.memory_space<vmem>>, vector<2x16x128xbf16>
    %4 = vector.shape_cast %3 : vector<2x16x128xbf16> to vector<32x128xbf16>
    %c0_3 = arith.constant 0 : index
    %c0_4 = arith.constant 0 : index
    %c0_5 = arith.constant 0 : index
    %5 = vector.load %arg2[%c0_3, %c0_4, %c0_5] : memref<3x128x256xbf16, #tpu.memory_space<vmem>>, vector<1x128x256xbf16>
    %6 = vector.shape_cast %5 : vector<1x128x256xbf16> to vector<128x256xbf16>
    %cst = arith.constant dense<0.000000e+00> : vector<32x256xf32>
    %7 = tpu.matmul %4, %6, %cst {dimension_numbers = #tpu.dot_dimension_numbers<[1], [0], [0], [1], [0, 0, 1, 1], [], []>} : vector<32x128xbf16>, vector<128x256xbf16>, vector<32x256xf32> -> vector<32x256xf32>
    %c0_6 = arith.constant 0 : index
    %c1 = arith.constant 1 : index
    %c0_7 = arith.constant 0 : index
    %8 = vector.load %arg1[%c0_6, %c1, %c0_7] : memref<2x18x128xbf16, #tpu.memory_space<vmem>>, vector<2x16x128xbf16>
    %9 = vector.shape_cast %8 : vector<2x16x128xbf16> to vector<32x128xbf16>
    %c1_8 = arith.constant 1 : index
    %c0_9 = arith.constant 0 : index
    %c0_10 = arith.constant 0 : index
    %10 = vector.load %arg2[%c1_8, %c0_9, %c0_10] : memref<3x128x256xbf16, #tpu.memory_space<vmem>>, vector<1x128x256xbf16>
    %11 = vector.shape_cast %10 : vector<1x128x256xbf16> to vector<128x256xbf16>
    %cst_11 = arith.constant dense<0.000000e+00> : vector<32x256xf32>
    %12 = tpu.matmul %9, %11, %cst_11 {dimension_numbers = #tpu.dot_dimension_numbers<[1], [0], [0], [1], [0, 0, 1, 1], [], []>} : vector<32x128xbf16>, vector<128x256xbf16>, vector<32x256xf32> -> vector<32x256xf32>
    %13 = arith.addf %7, %12 : vector<32x256xf32>
    %c0_12 = arith.constant 0 : index
    %c2 = arith.constant 2 : index
    %c0_13 = arith.constant 0 : index
    %14 = vector.load %arg1[%c0_12, %c2, %c0_13] : memref<2x18x128xbf16, #tpu.memory_space<vmem>>, vector<2x16x128xbf16>
    %15 = vector.shape_cast %14 : vector<2x16x128xbf16> to vector<32x128xbf16>
    %c2_14 = arith.constant 2 : index
    %c0_15 = arith.constant 0 : index
    %c0_16 = arith.constant 0 : index
    %16 = vector.load %arg2[%c2_14, %c0_15, %c0_16] : memref<3x128x256xbf16, #tpu.memory_space<vmem>>, vector<1x128x256xbf16>
    %17 = vector.shape_cast %16 : vector<1x128x256xbf16> to vector<128x256xbf16>
    %cst_17 = arith.constant dense<0.000000e+00> : vector<32x256xf32>
    %18 = tpu.matmul %15, %17, %cst_17 {dimension_numbers = #tpu.dot_dimension_numbers<[1], [0], [0], [1], [0, 0, 1, 1], [], []>} : vector<32x128xbf16>, vector<128x256xbf16>, vector<32x256xf32> -> vector<32x256xf32>
    %19 = arith.addf %13, %18 : vector<32x256xf32>
    %20 = vector.shape_cast %19 : vector<32x256xf32> to vector<2x16x256xf32>
    %21 = arith.truncf %20 : vector<2x16x256xf32> to vector<2x16x256xbf16>
    %c0_18 = arith.constant 0 : index
    %c1_19 = arith.constant 1 : index
    %c0_20 = arith.constant 0 : index
    %22 = vector.load %arg6[%c0_18, %c1_19, %c0_20] : memref<2x18x256xbf16, #tpu.memory_space<vmem>>, vector<2x16x256xbf16>
    tpu.vector_store %arg6[%c0_18, %c1_19, %c0_20], %21 {strides = array<i32>} : memref<2x18x256xbf16, #tpu.memory_space<vmem>>, vector<2x16x256xbf16>,
    %c0_21 = arith.constant 0 : index
    %c0_22 = arith.constant 0 : index
    %c0_23 = arith.constant 0 : index
    %23 = vector.load %arg6[%c0_21, %c0_22, %c0_23] : memref<2x18x256xbf16, #tpu.memory_space<vmem>>, vector<2x16x256xbf16>
    %24 = vector.shape_cast %23 : vector<2x16x256xbf16> to vector<32x256xbf16>
    %c0_24 = arith.constant 0 : index
    %c0_25 = arith.constant 0 : index
    %c0_26 = arith.constant 0 : index
    %25 = vector.load %arg3[%c0_24, %c0_25, %c0_26] : memref<3x256x256xbf16, #tpu.memory_space<vmem>>, vector<1x256x256xbf16>
    %26 = vector.shape_cast %25 : vector<1x256x256xbf16> to vector<256x256xbf16>
    %cst_27 = arith.constant dense<0.000000e+00> : vector<32x256xf32>
    %27 = tpu.matmul %24, %26, %cst_27 {dimension_numbers = #tpu.dot_dimension_numbers<[1], [0], [0], [1], [0, 0, 1, 1], [], []>} : vector<32x256xbf16>, vector<256x256xbf16>, vector<32x256xf32> -> vector<32x256xf32>
    %c0_28 = arith.constant 0 : index
    %c1_29 = arith.constant 1 : index
    %c0_30 = arith.constant 0 : index
    %28 = vector.load %arg6[%c0_28, %c1_29, %c0_30] : memref<2x18x256xbf16, #tpu.memory_space<vmem>>, vector<2x16x256xbf16>
    %29 = vector.shape_cast %28 : vector<2x16x256xbf16> to vector<32x256xbf16>
    %c1_31 = arith.constant 1 : index
    %c0_32 = arith.constant 0 : index
    %c0_33 = arith.constant 0 : index
    %30 = vector.load %arg3[%c1_31, %c0_32, %c0_33] : memref<3x256x256xbf16, #tpu.memory_space<vmem>>, vector<1x256x256xbf16>
    %31 = vector.shape_cast %30 : vector<1x256x256xbf16> to vector<256x256xbf16>
    %cst_34 = arith.constant dense<0.000000e+00> : vector<32x256xf32>
    %32 = tpu.matmul %29, %31, %cst_34 {dimension_numbers = #tpu.dot_dimension_numbers<[1], [0], [0], [1], [0, 0, 1, 1], [], []>} : vector<32x256xbf16>, vector<256x256xbf16>, vector<32x256xf32> -> vector<32x256xf32>
    %33 = arith.addf %27, %32 : vector<32x256xf32>
    %c0_35 = arith.constant 0 : index
    %c2_36 = arith.constant 2 : index
    %c0_37 = arith.constant 0 : index
    %34 = vector.load %arg6[%c0_35, %c2_36, %c0_37] : memref<2x18x256xbf16, #tpu.memory_space<vmem>>, vector<2x16x256xbf16>
    %35 = vector.shape_cast %34 : vector<2x16x256xbf16> to vector<32x256xbf16>
    %c2_38 = arith.constant 2 : index
    %c0_39 = arith.constant 0 : index
    %c0_40 = arith.constant 0 : index
    %36 = vector.load %arg3[%c2_38, %c0_39, %c0_40] : memref<3x256x256xbf16, #tpu.memory_space<vmem>>, vector<1x256x256xbf16>
    %37 = vector.shape_cast %36 : vector<1x256x256xbf16> to vector<256x256xbf16>
    %cst_41 = arith.constant dense<0.000000e+00> : vector<32x256xf32>
    %38 = tpu.matmul %35, %37, %cst_41 {dimension_numbers = #tpu.dot_dimension_numbers<[1], [0], [0], [1], [0, 0, 1, 1], [], []>} : vector<32x256xbf16>, vector<256x256xbf16>, vector<32x256xf32> -> vector<32x256xf32>
    %39 = arith.addf %33, %38 : vector<32x256xf32>
    %40 = vector.extract_strided_slice %39 {offsets = [0, 0], sizes = [32, 64], strides = [1, 1]} : vector<32x256xf32> to vector<32x64xf32>
    %41 = vector.extract_strided_slice %39 {offsets = [0, 64], sizes = [32, 64], strides = [1, 1]} : vector<32x256xf32> to vector<32x64xf32>
    %42 = vector.extract_strided_slice %39 {offsets = [0, 128], sizes = [32, 64], strides = [1, 1]} : vector<32x256xf32> to vector<32x64xf32>
    %43 = vector.extract_strided_slice %39 {offsets = [0, 192], sizes = [32, 64], strides = [1, 1]} : vector<32x256xf32> to vector<32x64xf32>
    %44 = arith.mulf %40, %40 : vector<32x64xf32>
    %45 = arith.mulf %42, %42 : vector<32x64xf32>
    %46 = arith.addf %44, %45 : vector<32x64xf32>
    %47 = arith.mulf %41, %41 : vector<32x64xf32>
    %48 = arith.mulf %43, %43 : vector<32x64xf32>
    %49 = arith.addf %47, %48 : vector<32x64xf32>
    %50 = arith.cmpf ogt, %49, %46 : vector<32x64xf32>
    %51 = arith.select %50, %41, %40 : vector<32x64xi1>, vector<32x64xf32>
    %52 = arith.select %50, %43, %42 : vector<32x64xi1>, vector<32x64xf32>
    %c0_42 = arith.constant 0 : index
    %c0_43 = arith.constant 0 : index
    %c0_44 = arith.constant 0 : index
    %53 = vector.load %arg4[%c0_42, %c0_43, %c0_44] : memref<2x16x32xf32, #tpu.memory_space<vmem>>, vector<1x16x32xf32>
    %54 = vector.shape_cast %53 : vector<1x16x32xf32> to vector<16x32xf32>
    %c1_45 = arith.constant 1 : index
    %c0_46 = arith.constant 0 : index
    %c0_47 = arith.constant 0 : index
    %55 = vector.load %arg4[%c1_45, %c0_46, %c0_47] : memref<2x16x32xf32, #tpu.memory_space<vmem>>, vector<1x16x32xf32>
    %56 = vector.shape_cast %55 : vector<1x16x32xf32> to vector<16x32xf32>
    %cst_48 = arith.constant dense<0.000000e+00> : vector<16x64xf32>
    %57 = tpu.matmul %54, %51, %cst_48 {dimension_numbers = #tpu.dot_dimension_numbers<[1], [0], [0], [1], [0, 0, 1, 1], [], []>} : vector<16x32xf32>, vector<32x64xf32>, vector<16x64xf32> -> vector<16x64xf32>
    %cst_49 = arith.constant dense<0.000000e+00> : vector<16x64xf32>
    %58 = tpu.matmul %54, %52, %cst_49 {dimension_numbers = #tpu.dot_dimension_numbers<[1], [0], [0], [1], [0, 0, 1, 1], [], []>} : vector<16x32xf32>, vector<32x64xf32>, vector<16x64xf32> -> vector<16x64xf32>
    %cst_50 = arith.constant dense<0.000000e+00> : vector<16x64xf32>
    %59 = tpu.matmul %56, %51, %cst_50 {dimension_numbers = #tpu.dot_dimension_numbers<[1], [0], [0], [1], [0, 0, 1, 1], [], []>} : vector<16x32xf32>, vector<32x64xf32>, vector<16x64xf32> -> vector<16x64xf32>
    %cst_51 = arith.constant dense<0.000000e+00> : vector<16x64xf32>
    %60 = tpu.matmul %56, %52, %cst_51 {dimension_numbers = #tpu.dot_dimension_numbers<[1], [0], [0], [1], [0, 0, 1, 1], [], []>} : vector<16x32xf32>, vector<32x64xf32>, vector<16x64xf32> -> vector<16x64xf32>
    %61 = arith.mulf %59, %59 : vector<16x64xf32>
    %62 = arith.mulf %60, %60 : vector<16x64xf32>
    %63 = arith.addf %61, %62 : vector<16x64xf32>
    %64 = arith.mulf %57, %57 : vector<16x64xf32>
    %65 = arith.mulf %58, %58 : vector<16x64xf32>
    %66 = arith.addf %64, %65 : vector<16x64xf32>
    %67 = arith.cmpf ogt, %63, %66 : vector<16x64xf32>
    %68 = arith.select %67, %59, %57 : vector<16x64xi1>, vector<16x64xf32>
    %cst_52 = arith.constant 0.000000e+00 : f32
    %69 = vector.broadcast %cst_52 : f32 to vector<16x64xf32>
    %70 = arith.maximumf %68, %69 : vector<16x64xf32>
    %71 = arith.select %67, %60, %58 : vector<16x64xi1>, vector<16x64xf32>
    %cst_53 = arith.constant 0.000000e+00 : f32
    %72 = vector.broadcast %cst_53 : f32 to vector<16x64xf32>
    %73 = arith.maximumf %71, %72 : vector<16x64xf32>
    %74 = vector.extract_strided_slice %70 {offsets = [0, 0], sizes = [8, 64], strides = [1, 1]} : vector<16x64xf32> to vector<8x64xf32>
    %c0_54 = arith.constant 0 : index
    %c0_55 = arith.constant 0 : index
    %c0_56 = arith.constant 0 : index
    %c0_57 = arith.constant 0 : index
    %75 = vector.load %arg5[%c0_54, %c0_55, %c0_56, %c0_57] : memref<2x2x8x64xf32, #tpu.memory_space<vmem>>, vector<1x1x8x64xf32>
    %76 = vector.shape_cast %75 : vector<1x1x8x64xf32> to vector<8x64xf32>
    %77 = vector.shape_cast %74 : vector<8x64xf32> to vector<1x1x8x64xf32>
    tpu.vector_store %arg5[%c0_54, %c0_55, %c0_56, %c0_57], %77 {strides = array<i32>} : memref<2x2x8x64xf32, #tpu.memory_space<vmem>>, vector<1x1x8x64xf32>,
    %78 = vector.extract_strided_slice %73 {offsets = [0, 0], sizes = [8, 64], strides = [1, 1]} : vector<16x64xf32> to vector<8x64xf32>
    %c0_58 = arith.constant 0 : index
    %c1_59 = arith.constant 1 : index
    %c0_60 = arith.constant 0 : index
    %c0_61 = arith.constant 0 : index
    %79 = vector.load %arg5[%c0_58, %c1_59, %c0_60, %c0_61] : memref<2x2x8x64xf32, #tpu.memory_space<vmem>>, vector<1x1x8x64xf32>
    %80 = vector.shape_cast %79 : vector<1x1x8x64xf32> to vector<8x64xf32>
    %81 = vector.shape_cast %78 : vector<8x64xf32> to vector<1x1x8x64xf32>
    tpu.vector_store %arg5[%c0_58, %c1_59, %c0_60, %c0_61], %81 {strides = array<i32>} : memref<2x2x8x64xf32, #tpu.memory_space<vmem>>, vector<1x1x8x64xf32>,
    %82 = vector.extract_strided_slice %70 {offsets = [8, 0], sizes = [8, 64], strides = [1, 1]} : vector<16x64xf32> to vector<8x64xf32>
    %c1_62 = arith.constant 1 : index
    %c0_63 = arith.constant 0 : index
    %c0_64 = arith.constant 0 : index
    %c0_65 = arith.constant 0 : index
    %83 = vector.load %arg5[%c1_62, %c0_63, %c0_64, %c0_65] : memref<2x2x8x64xf32, #tpu.memory_space<vmem>>, vector<1x1x8x64xf32>
    %84 = vector.shape_cast %83 : vector<1x1x8x64xf32> to vector<8x64xf32>
    %85 = vector.shape_cast %82 : vector<8x64xf32> to vector<1x1x8x64xf32>
    tpu.vector_store %arg5[%c1_62, %c0_63, %c0_64, %c0_65], %85 {strides = array<i32>} : memref<2x2x8x64xf32, #tpu.memory_space<vmem>>, vector<1x1x8x64xf32>,
    %86 = vector.extract_strided_slice %73 {offsets = [8, 0], sizes = [8, 64], strides = [1, 1]} : vector<16x64xf32> to vector<8x64xf32>
    %c1_66 = arith.constant 1 : index
    %c1_67 = arith.constant 1 : index
    %c0_68 = arith.constant 0 : index
    %c0_69 = arith.constant 0 : index
    %87 = vector.load %arg5[%c1_66, %c1_67, %c0_68, %c0_69] : memref<2x2x8x64xf32, #tpu.memory_space<vmem>>, vector<1x1x8x64xf32>
    %88 = vector.shape_cast %87 : vector<1x1x8x64xf32> to vector<8x64xf32>
    %89 = vector.shape_cast %86 : vector<8x64xf32> to vector<1x1x8x64xf32>
    tpu.vector_store %arg5[%c1_66, %c1_67, %c0_68, %c0_69], %89 {strides = array<i32>} : memref<2x2x8x64xf32, #tpu.memory_space<vmem>>, vector<1x1x8x64xf32>,
    return
  }
  func.func @transform_0(%arg0: i32) -> (i32, i32, i32) {
    %c0_i32 = arith.constant 0 : i32
    %c0_i32_0 = arith.constant 0 : i32
    %c0_i32_1 = arith.constant 0 : i32
    return %arg0, %c0_i32, %c0_i32_0 : i32, i32, i32
  }
  func.func @transform_1(%arg0: i32) -> (i32, i32, i32) {
    %c0_i32 = arith.constant 0 : i32
    %c0_i32_0 = arith.constant 0 : i32
    %c0_i32_1 = arith.constant 0 : i32
    %c0_i32_2 = arith.constant 0 : i32
    return %c0_i32, %c0_i32_0, %c0_i32_1 : i32, i32, i32
  }
  func.func @transform_2(%arg0: i32) -> (i32, i32, i32) {
    %c0_i32 = arith.constant 0 : i32
    %c0_i32_0 = arith.constant 0 : i32
    %c0_i32_1 = arith.constant 0 : i32
    %c0_i32_2 = arith.constant 0 : i32
    return %c0_i32, %c0_i32_0, %c0_i32_1 : i32, i32, i32
  }
  func.func @transform_3(%arg0: i32) -> (i32, i32, i32) {
    %c0_i32 = arith.constant 0 : i32
    %c0_i32_0 = arith.constant 0 : i32
    %c0_i32_1 = arith.constant 0 : i32
    %c0_i32_2 = arith.constant 0 : i32
    return %c0_i32, %c0_i32_0, %c0_i32_1 : i32, i32, i32
  }
  func.func @transform_4(%arg0: i32) -> (i32, i32, i32, i32) {
    %c0_i32 = arith.constant 0 : i32
    %c0_i32_0 = arith.constant 0 : i32
    %c0_i32_1 = arith.constant 0 : i32
    %c0_i32_2 = arith.constant 0 : i32
    return %arg0, %c0_i32, %c0_i32_0, %c0_i32_1 : i32, i32, i32, i32
  }
}

</mosaic_0001>

<llo_original>
// kernel: double_igconv_forward.1
$region0: #{double_igconv_forward.1}
  #allocation0 [shape = 'u32[]', space=smem, size = 0x4, offset = 0x4, fixed_abs, tag = 'smem constant byte address 0x4 - core index']
  #allocation1 [shape = 'u32[144,128]{1,0:T(1,128)}', space=vmem, size = 0x12000, scoped, tag = 'internal scratch']
  #allocation2 [shape = 'bf16[2,18,256]{2,1,0:T(8,128)(2,1)}', space=vmem, size = 0x6000, scoped, tag = 'scratch operand']
  %s0 = inlined_call_operand.vmem [shape: bf16[2,18,128], index: 0, kind: input, shape index: {}]
  %s1 = inlined_call_operand.vmem [shape: bf16[3,128,256], index: 1, kind: input, shape index: {}]
  %s2 = inlined_call_operand.vmem [shape: bf16[3,256,256], index: 2, kind: input, shape index: {}]
  %s3 = inlined_call_operand.vmem [shape: f32[2,16,32], index: 3, kind: input, shape index: {}]
  %s4 = inlined_call_operand.vmem [shape: f32[2,2,8,64], index: 4, kind: output, shape index: {}]
  %s5 = sld [smem:[#allocation0]]
  $region30: #{double_igconv_forward.1} parent=0
    _
  %s7 = ssub.s32 1, %s5
  %s8 = scalar_select 0, %s7, %s5
  // Predicated region
  $region2: #{double_igconv_forward.1} parent=0 // pred_check
    _
  $region3: #{double_igconv_forward.1} parent=0 // pred_check_branch
    %10 = sbr.rel (0) target = $region5
  $region4: #{double_igconv_forward.1} parent=0 // pred_region
    _
  $region5: #{double_igconv_forward.1} parent=0 // pred_fallthru
    _
  // Predicated region
  $region6: #{double_igconv_forward.1} parent=0 // pred_check
    _
  $region7: #{double_igconv_forward.1} parent=0 // pred_check_branch
    %12 = sbr.rel (0) target = $region9
  $region8: #{double_igconv_forward.1} parent=0 // pred_region
    _
  $region9: #{double_igconv_forward.1} parent=0 // pred_fallthru
    _
  // Predicated region
  $region10: #{double_igconv_forward.1} parent=0 // pred_check
    _
  $region11: #{double_igconv_forward.1} parent=0 // pred_check_branch
    %14 = sbr.rel (0) target = $region13
  $region12: #{double_igconv_forward.1} parent=0 // pred_region
    _
  $region13: #{double_igconv_forward.1} parent=0 // pred_fallthru
    _
  // Predicated region
  $region14: #{double_igconv_forward.1} parent=0 // pred_check
    _
  $region15: #{double_igconv_forward.1} parent=0 // pred_check_branch
    %16 = sbr.rel (0) target = $region17
  $region16: #{double_igconv_forward.1} parent=0 // pred_region
    _
  $region17: #{double_igconv_forward.1} parent=0 // pred_fallthru
    _
  %p18 = scmp.eq.s32.totalorder 0, 0
  // Predicated region
  $region18: #{double_igconv_forward.1} parent=0 // pred_check
    %p19 = pneg %p18
  $region19: #{double_igconv_forward.1} parent=0 // pred_check_branch
    %21 = sbr.rel (%p19) target = $region21
  $region20: #{double_igconv_forward.1} parent=0 // pred_region
    %22 = vst [vmem:[#allocation2] sm:$0xff] 0
    %23 = vst [vmem:[#allocation2 + $0x8] sm:$0xff] 0
    %24 = vst [vmem:[#allocation2 + $0x10] sm:$0x11] 0
    %25 = vst [vmem:[#allocation2 + $0x18] sm:$0xff] 0
    %26 = vst [vmem:[#allocation2 + $0x20] sm:$0xff] 0
    %27 = vst [vmem:[#allocation2 + $0x28] sm:$0x11] 0
  $region21: #{double_igconv_forward.1} parent=0 // pred_fallthru
    _
  %v28 = vld [vmem:[%s0] sm:$0xf]
  %v29 = vld [vmem:[%s0 + $0x4] sm:$0xf]
  %v30 = vld [vmem:[%s0 + $0xc] sm:$0xf]
  %v31 = vld [vmem:[%s0 + $0x10] sm:$0xf]
  %v32 = vld [vmem:[%s1] sm:$0xff]
  %v33 = vld [vmem:[%s1 + $0x8] sm:$0xff]
  %v34 = vld [vmem:[%s1 + $0x10] sm:$0xff]
  %v35 = vld [vmem:[%s1 + $0x18] sm:$0xff]
  %v36 = vld [vmem:[%s1 + $0x20] sm:$0xff]
  %v37 = vld [vmem:[%s1 + $0x28] sm:$0xff]
  %v38 = vld [vmem:[%s1 + $0x30] sm:$0xff]
  %v39 = vld [vmem:[%s1 + $0x38] sm:$0xff]
  %v40 = vld [vmem:[%s1 + $0x40] sm:$0xff]
  %v41 = vld [vmem:[%s1 + $0x48] sm:$0xff]
  %v42 = vld [vmem:[%s1 + $0x50] sm:$0xff]
  %v43 = vld [vmem:[%s1 + $0x58] sm:$0xff]
  %v44 = vld [vmem:[%s1 + $0x60] sm:$0xff]
  %v45 = vld [vmem:[%s1 + $0x68] sm:$0xff]
  %v46 = vld [vmem:[%s1 + $0x70] sm:$0xff]
  %v47 = vld [vmem:[%s1 + $0x78] sm:$0xff]
  %v48 = vld [vmem:[%s0 + $0x8] sm:$0x1]
  %v49 = vld [vmem:[%s0 + $0x14] sm:$0x1]
  %vm50 = vsmask.f32 3328
  %vm51 = vsmask.f32 7440
  %vm52 = vmor %vm50, %vm51
  %v54 = vshrl.u32 %v28, 16
  %v56 = vrot.slane %v54, 4
  %v57 = vshll.u32 %v28, 16
  %v59 = vrot.slane %v57, 5
  %v60 = vor.u32 %v56, %v59
  %v61 = vrot.slane %v60, 4
  %v63 = vshll.u32 %v29, 16
  %v65 = vrot.slane %v63, 5
  %v66 = vsel %vm52, %v61, %v65
  %v67 = vshrl.u32 %v29, 16
  %v69 = vrot.slane %v67, 4
  %v70 = vor.u32 %v69, %v65
  %v71 = vrot.slane %v70, 4
  %v73 = vshll.u32 %v48, 16
  %v75 = vrot.slane %v73, 5
  %v76 = vsel %vm52, %v71, %v75
  %v78 = vshrl.u32 %v30, 16
  %v80 = vrot.slane %v78, 4
  %v81 = vshll.u32 %v30, 16
  %v83 = vrot.slane %v81, 5
  %v84 = vor.u32 %v80, %v83
  %v85 = vrot.slane %v84, 4
  %v87 = vshll.u32 %v31, 16
  %v89 = vrot.slane %v87, 5
  %v90 = vsel %vm52, %v85, %v89
  %v91 = vshrl.u32 %v31, 16
  %v93 = vrot.slane %v91, 4
  %v94 = vor.u32 %v93, %v89
  %v95 = vrot.slane %v94, 4
  %v97 = vshll.u32 %v49, 16
  %v99 = vrot.slane %v97, 5
  %v100 = vsel %vm52, %v95, %v99
  %s101 = scalar_lea.vmem %s1, 128
  %v102 = vld [vmem:[%s101] sm:$0xff]
  %v103 = vld [vmem:[%s101 + $0x8] sm:$0xff]
  %v104 = vld [vmem:[%s101 + $0x10] sm:$0xff]
  %v105 = vld [vmem:[%s101 + $0x18] sm:$0xff]
  %v106 = vld [vmem:[%s101 + $0x20] sm:$0xff]
  %v107 = vld [vmem:[%s101 + $0x28] sm:$0xff]
  %v108 = vld [vmem:[%s101 + $0x30] sm:$0xff]
  %v109 = vld [vmem:[%s101 + $0x38] sm:$0xff]
  %v110 = vld [vmem:[%s101 + $0x40] sm:$0xff]
  %v111 = vld [vmem:[%s101 + $0x48] sm:$0xff]
  %v112 = vld [vmem:[%s101 + $0x50] sm:$0xff]
  %v113 = vld [vmem:[%s101 + $0x58] sm:$0xff]
  %v114 = vld [vmem:[%s101 + $0x60] sm:$0xff]
  %v115 = vld [vmem:[%s101 + $0x68] sm:$0xff]
  %v116 = vld [vmem:[%s101 + $0x70] sm:$0xff]
  %v117 = vld [vmem:[%s101 + $0x78] sm:$0xff]
  %v118 = vunpack.c.l.b16 %v66
  %v119 = vunpack.c.l.b16 %v76
  %v120 = vunpack.c.l.b16 %v90
  %v121 = vunpack.c.l.b16 %v100
  %v122 = vpack.c.b16 %v119, %v118
  %v123 = vpack.c.b16 %v121, %v120
  %v142 = vunpack.c.l.b16 %v102
  %v143 = vunpack.c.h.b16 %v102
  %v144 = vunpack.c.l.b16 %v103
  %v145 = vunpack.c.h.b16 %v103
  %v146 = vunpack.c.l.b16 %v104
  %v147 = vunpack.c.h.b16 %v104
  %v148 = vunpack.c.l.b16 %v105
  %v149 = vunpack.c.h.b16 %v105
  %v150 = vunpack.c.l.b16 %v106
  %v151 = vunpack.c.h.b16 %v106
  %v152 = vunpack.c.l.b16 %v107
  %v153 = vunpack.c.h.b16 %v107
  %v154 = vunpack.c.l.b16 %v108
  %v155 = vunpack.c.h.b16 %v108
  %v156 = vunpack.c.l.b16 %v109
  %v157 = vunpack.c.h.b16 %v109
  %v158 = vunpack.c.l.b16 %v110
  %v159 = vunpack.c.h.b16 %v110
  %v160 = vunpack.c.l.b16 %v111
  %v161 = vunpack.c.h.b16 %v111
  %v162 = vunpack.c.l.b16 %v112
  %v163 = vunpack.c.h.b16 %v112
  %v164 = vunpack.c.l.b16 %v113
  %v165 = vunpack.c.h.b16 %v113
  %v166 = vunpack.c.l.b16 %v114
  %v167 = vunpack.c.h.b16 %v114
  %v168 = vunpack.c.l.b16 %v115
  %v169 = vunpack.c.h.b16 %v115
  %v170 = vunpack.c.l.b16 %v116
  %v171 = vunpack.c.h.b16 %v116
  %v172 = vunpack.c.l.b16 %v117
  %v173 = vunpack.c.h.b16 %v117
  %v174 = vpack.c.b16 %v144, %v142
  %v175 = vpack.c.b16 %v145, %v143
  %v176 = vpack.c.b16 %v148, %v146
  %v177 = vpack.c.b16 %v149, %v147
  %v178 = vpack.c.b16 %v152, %v150
  %v179 = vpack.c.b16 %v153, %v151
  %v180 = vpack.c.b16 %v156, %v154
  %v181 = vpack.c.b16 %v157, %v155
  %v182 = vpack.c.b16 %v160, %v158
  %v183 = vpack.c.b16 %v161, %v159
  %v184 = vpack.c.b16 %v164, %v162
  %v185 = vpack.c.b16 %v165, %v163
  %v186 = vpack.c.b16 %v168, %v166
  %v187 = vpack.c.b16 %v169, %v167
  %v188 = vpack.c.b16 %v172, %v170
  %v189 = vpack.c.b16 %v173, %v171
  %206 = vmatprep.subr.bf16.mxu0 %v175
  %207 = vmatpush1.bf16.msra.mxu0 %v174
  %208 = vmatprep.subr.bf16.mxu0 %v177
  %209 = vmatpush1.bf16.msra.mxu0 %v176
  %210 = vmatprep.subr.bf16.mxu0 %v179
  %211 = vmatpush1.bf16.msra.mxu0 %v178
  %212 = vmatprep.subr.bf16.mxu0 %v181
  %213 = vmatpush1.bf16.msra.mxu0 %v180
  %214 = vmatprep.subr.bf16.mxu0 %v183
  %215 = vmatpush1.bf16.msra.mxu0 %v182
  %216 = vmatprep.subr.bf16.mxu0 %v185
  %217 = vmatpush1.bf16.msra.mxu0 %v184
  %218 = vmatprep.subr.bf16.mxu0 %v187
  %219 = vmatpush1.bf16.msra.mxu0 %v186
  %220 = vmatprep.subr.bf16.mxu0 %v189
  %221 = vmatpush1.bf16.msra.mxu0 %v188
  %222 = vmatprep.subr.bf16.mxu0 0
  %223 = vmatpush1.bf16.msra.mxu0 0
  %224 = vmatprep.subr.bf16.mxu0 0
  %225 = vmatpush1.bf16.msra.mxu0 0
  %226 = vmatprep.subr.bf16.mxu0 0
  %227 = vmatpush1.bf16.msra.mxu0 0
  %228 = vmatprep.subr.bf16.mxu0 0
  %229 = vmatpush1.bf16.msra.mxu0 0
  %230 = vmatprep.subr.bf16.mxu0 0
  %231 = vmatpush1.bf16.msra.mxu0 0
  %232 = vmatprep.subr.bf16.mxu0 0
  %233 = vmatpush1.bf16.msra.mxu0 0
  %234 = vmatprep.subr.bf16.mxu0 0
  %235 = vmatpush1.bf16.msra.mxu0 0
  %236 = vmatprep.subr.bf16.mxu0 0
  %237 = vmatpush1.bf16.msra.mxu0 0
  %238 = vmatprep.mubr.bf16.mxu0 0
  %239 = vmatmul.mubr.bf16.gmra.mrb[0].mxu0 %v122
  %v240 = vpop.f32.mrb[0].mxu0
  %v241 = vadd.f32 0.0, %v240
  %v242 = vpop.f32.mrb[0].mxu0
  %v243 = vadd.f32 0.0, %v242
  %v244 = vpop.f32.mrb[0].mxu0
  %v245 = vadd.f32 0.0, %v244
  %v246 = vpop.f32.mrb[0].mxu0
  %v247 = vadd.f32 0.0, %v246
  %248 = vmatprep.mubr.bf16.mxu0 0
  %249 = vmatmul.mubr.bf16.gmra.mrb[0].mxu0 %v123
  %v250 = vpop.f32.mrb[0].mxu0
  %v251 = vadd.f32 0.0, %v250
  %v252 = vpop.f32.mrb[0].mxu0
  %v253 = vadd.f32 0.0, %v252
  %v254 = vpop.f32.mrb[0].mxu0
  %v255 = vadd.f32 0.0, %v254
  %v256 = vpop.f32.mrb[0].mxu0
  %v257 = vadd.f32 0.0, %v256
  %258 = vdwg.mxu0
  %v263 = vunpack.c.l.b16 %v28
  %v264 = vunpack.c.l.b16 %v29
  %v265 = vunpack.c.l.b16 %v30
  %v266 = vunpack.c.l.b16 %v31
  %v267 = vpack.c.b16 %v264, %v263
  %v268 = vpack.c.b16 %v266, %v265
  %v287 = vunpack.c.l.b16 %v32
  %v288 = vunpack.c.h.b16 %v32
  %v289 = vunpack.c.l.b16 %v33
  %v290 = vunpack.c.h.b16 %v33
  %v291 = vunpack.c.l.b16 %v34
  %v292 = vunpack.c.h.b16 %v34
  %v293 = vunpack.c.l.b16 %v35
  %v294 = vunpack.c.h.b16 %v35
  %v295 = vunpack.c.l.b16 %v36
  %v296 = vunpack.c.h.b16 %v36
  %v297 = vunpack.c.l.b16 %v37
  %v298 = vunpack.c.h.b16 %v37
  %v299 = vunpack.c.l.b16 %v38
  %v300 = vunpack.c.h.b16 %v38
  %v301 = vunpack.c.l.b16 %v39
  %v302 = vunpack.c.h.b16 %v39
  %v303 = vunpack.c.l.b16 %v40
  %v304 = vunpack.c.h.b16 %v40
  %v305 = vunpack.c.l.b16 %v41
  %v306 = vunpack.c.h.b16 %v41
  %v307 = vunpack.c.l.b16 %v42
  %v308 = vunpack.c.h.b16 %v42
  %v309 = vunpack.c.l.b16 %v43
  %v310 = vunpack.c.h.b16 %v43
  %v311 = vunpack.c.l.b16 %v44
  %v312 = vunpack.c.h.b16 %v44
  %v313 = vunpack.c.l.b16 %v45
  %v314 = vunpack.c.h.b16 %v45
  %v315 = vunpack.c.l.b16 %v46
  %v316 = vunpack.c.h.b16 %v46
  %v317 = vunpack.c.l.b16 %v47
  %v318 = vunpack.c.h.b16 %v47
  %v319 = vpack.c.b16 %v289, %v287
  %v320 = vpack.c.b16 %v290, %v288
  %v321 = vpack.c.b16 %v293, %v291
  %v322 = vpack.c.b16 %v294, %v292
  %v323 = vpack.c.b16 %v297, %v295
  %v324 = vpack.c.b16 %v298, %v296
  %v325 = vpack.c.b16 %v301, %v299
  %v326 = vpack.c.b16 %v302, %v300
  %v327 = vpack.c.b16 %v305, %v303
  %v328 = vpack.c.b16 %v306, %v304
  %v329 = vpack.c.b16 %v309, %v307
  %v330 = vpack.c.b16 %v310, %v308
  %v331 = vpack.c.b16 %v313, %v311
  %v332 = vpack.c.b16 %v314, %v312
  %v333 = vpack.c.b16 %v317, %v315
  %v334 = vpack.c.b16 %v318, %v316
  %351 = vmatprep.subr.bf16.mxu0 %v320
  %352 = vmatpush1.bf16.msra.mxu0 %v319
  %353 = vmatprep.subr.bf16.mxu0 %v322
  %354 = vmatpush1.bf16.msra.mxu0 %v321
  %355 = vmatprep.subr.bf16.mxu0 %v324
  %356 = vmatpush1.bf16.msra.mxu0 %v323
  %357 = vmatprep.subr.bf16.mxu0 %v326
  %358 = vmatpush1.bf16.msra.mxu0 %v325
  %359 = vmatprep.subr.bf16.mxu0 %v328
  %360 = vmatpush1.bf16.msra.mxu0 %v327
  %361 = vmatprep.subr.bf16.mxu0 %v330
  %362 = vmatpush1.bf16.msra.mxu0 %v329
  %363 = vmatprep.subr.bf16.mxu0 %v332
  %364 = vmatpush1.bf16.msra.mxu0 %v331
  %365 = vmatprep.subr.bf16.mxu0 %v334
  %366 = vmatpush1.bf16.msra.mxu0 %v333
  %367 = vmatprep.subr.bf16.mxu0 0
  %368 = vmatpush1.bf16.msra.mxu0 0
  %369 = vmatprep.subr.bf16.mxu0 0
  %370 = vmatpush1.bf16.msra.mxu0 0
  %371 = vmatprep.subr.bf16.mxu0 0
  %372 = vmatpush1.bf16.msra.mxu0 0
  %373 = vmatprep.subr.bf16.mxu0 0
  %374 = vmatpush1.bf16.msra.mxu0 0
  %375 = vmatprep.subr.bf16.mxu0 0
  %376 = vmatpush1.bf16.msra.mxu0 0
  %377 = vmatprep.subr.bf16.mxu0 0
  %378 = vmatpush1.bf16.msra.mxu0 0
  %379 = vmatprep.subr.bf16.mxu0 0
  %380 = vmatpush1.bf16.msra.mxu0 0
  %381 = vmatprep.subr.bf16.mxu0 0
  %382 = vmatpush1.bf16.msra.mxu0 0
  %383 = vmatprep.mubr.bf16.mxu0 0
  %384 = vmatmul.mubr.bf16.gmra.mrb[0].mxu0 %v267
  %v385 = vpop.f32.mrb[0].mxu0
  %v386 = vadd.f32 %v241, %v385
  %v387 = vpop.f32.mrb[0].mxu0
  %v388 = vadd.f32 %v243, %v387
  %v389 = vpop.f32.mrb[0].mxu0
  %v390 = vadd.f32 %v245, %v389
  %v391 = vpop.f32.mrb[0].mxu0
  %v392 = vadd.f32 %v247, %v391
  %393 = vmatprep.mubr.bf16.mxu0 0
  %394 = vmatmul.mubr.bf16.gmra.mrb[0].mxu0 %v268
  %v395 = vpop.f32.mrb[0].mxu0
  %v396 = vadd.f32 %v251, %v395
  %v397 = vpop.f32.mrb[0].mxu0
  %v398 = vadd.f32 %v253, %v397
  %v399 = vpop.f32.mrb[0].mxu0
  %v400 = vadd.f32 %v255, %v399
  %v401 = vpop.f32.mrb[0].mxu0
  %v402 = vadd.f32 %v257, %v401
  %403 = vdwg.mxu0
  %v404 = vld [vmem:[%s0] sm:$0xe]
  %v405 = vld [vmem:[%s0 + $0xc] sm:$0xe]
  %vm410 = vcmask 1042432
  %vm411 = vcmask 1046532
  %vm412 = vmor %vm410, %vm411
  %v413 = vrot.slane %v404, 5
  %v414 = vrot.slane %v413, 4
  %v415 = vrot.slane %v29, 5
  %v416 = vsel %vm412, %v414, %v415
  %v417 = vrot.slane %v415, 4
  %v418 = vrot.slane %v48, 5
  %v419 = vsel %vm412, %v417, %v418
  %v420 = vrot.slane %v405, 5
  %v421 = vrot.slane %v420, 4
  %v422 = vrot.slane %v31, 5
  %v423 = vsel %vm412, %v421, %v422
  %v424 = vrot.slane %v422, 4
  %v425 = vrot.slane %v49, 5
  %v426 = vsel %vm412, %v424, %v425
  %s427 = scalar_lea.vmem %s1, 256
  %v428 = vld [vmem:[%s427] sm:$0xff]
  %v429 = vld [vmem:[%s427 + $0x8] sm:$0xff]
  %v430 = vld [vmem:[%s427 + $0x10] sm:$0xff]
  %v431 = vld [vmem:[%s427 + $0x18] sm:$0xff]
  %v432 = vld [vmem:[%s427 + $0x20] sm:$0xff]
  %v433 = vld [vmem:[%s427 + $0x28] sm:$0xff]
  %v434 = vld [vmem:[%s427 + $0x30] sm:$0xff]
  %v435 = vld [vmem:[%s427 + $0x38] sm:$0xff]
  %v436 = vld [vmem:[%s427 + $0x40] sm:$0xff]
  %v437 = vld [vmem:[%s427 + $0x48] sm:$0xff]
  %v438 = vld [vmem:[%s427 + $0x50] sm:$0xff]
  %v439 = vld [vmem:[%s427 + $0x58] sm:$0xff]
  %v440 = vld [vmem:[%s427 + $0x60] sm:$0xff]
  %v441 = vld [vmem:[%s427 + $0x68] sm:$0xff]
  %v442 = vld [vmem:[%s427 + $0x70] sm:$0xff]
  %v443 = vld [vmem:[%s427 + $0x78] sm:$0xff]
  %v444 = vunpack.c.l.b16 %v416
  %v445 = vunpack.c.l.b16 %v419
  %v446 = vunpack.c.l.b16 %v423
  %v447 = vunpack.c.l.b16 %v426
  %v448 = vpack.c.b16 %v445, %v444
  %v449 = vpack.c.b16 %v447, %v446
  %v468 = vunpack.c.l.b16 %v428
  %v469 = vunpack.c.h.b16 %v428
  %v470 = vunpack.c.l.b16 %v429
  %v471 = vunpack.c.h.b16 %v429
  %v472 = vunpack.c.l.b16 %v430
  %v473 = vunpack.c.h.b16 %v430
  %v474 = vunpack.c.l.b16 %v431
  %v475 = vunpack.c.h.b16 %v431
  %v476 = vunpack.c.l.b16 %v432
  %v477 = vunpack.c.h.b16 %v432
  %v478 = vunpack.c.l.b16 %v433
  %v479 = vunpack.c.h.b16 %v433
  %v480 = vunpack.c.l.b16 %v434
  %v481 = vunpack.c.h.b16 %v434
  %v482 = vunpack.c.l.b16 %v435
  %v483 = vunpack.c.h.b16 %v435
  %v484 = vunpack.c.l.b16 %v436
  %v485 = vunpack.c.h.b16 %v436
  %v486 = vunpack.c.l.b16 %v437
  %v487 = vunpack.c.h.b16 %v437
  %v488 = vunpack.c.l.b16 %v438
  %v489 = vunpack.c.h.b16 %v438
  %v490 = vunpack.c.l.b16 %v439
  %v491 = vunpack.c.h.b16 %v439
  %v492 = vunpack.c.l.b16 %v440
  %v493 = vunpack.c.h.b16 %v440
  %v494 = vunpack.c.l.b16 %v441
  %v495 = vunpack.c.h.b16 %v441
  %v496 = vunpack.c.l.b16 %v442
  %v497 = vunpack.c.h.b16 %v442
  %v498 = vunpack.c.l.b16 %v443
  %v499 = vunpack.c.h.b16 %v443
  %v500 = vpack.c.b16 %v470, %v468
  %v501 = vpack.c.b16 %v471, %v469
  %v502 = vpack.c.b16 %v474, %v472
  %v503 = vpack.c.b16 %v475, %v473
  %v504 = vpack.c.b16 %v478, %v476
  %v505 = vpack.c.b16 %v479, %v477
  %v506 = vpack.c.b16 %v482, %v480
  %v507 = vpack.c.b16 %v483, %v481
  %v508 = vpack.c.b16 %v486, %v484
  %v509 = vpack.c.b16 %v487, %v485
  %v510 = vpack.c.b16 %v490, %v488
  %v511 = vpack.c.b16 %v491, %v489
  %v512 = vpack.c.b16 %v494, %v492
  %v513 = vpack.c.b16 %v495, %v493
  %v514 = vpack.c.b16 %v498, %v496
  %v515 = vpack.c.b16 %v499, %v497
  %532 = vmatprep.subr.bf16.mxu0 %v501
  %533 = vmatpush1.bf16.msra.mxu0 %v500
  %534 = vmatprep.subr.bf16.mxu0 %v503
  %535 = vmatpush1.bf16.msra.mxu0 %v502
  %536 = vmatprep.subr.bf16.mxu0 %v505
  %537 = vmatpush1.bf16.msra.mxu0 %v504
  %538 = vmatprep.subr.bf16.mxu0 %v507
  %539 = vmatpush1.bf16.msra.mxu0 %v506
  %540 = vmatprep.subr.bf16.mxu0 %v509
  %541 = vmatpush1.bf16.msra.mxu0 %v508
  %542 = vmatprep.subr.bf16.mxu0 %v511
  %543 = vmatpush1.bf16.msra.mxu0 %v510
  %544 = vmatprep.subr.bf16.mxu0 %v513
  %545 = vmatpush1.bf16.msra.mxu0 %v512
  %546 = vmatprep.subr.bf16.mxu0 %v515
  %547 = vmatpush1.bf16.msra.mxu0 %v514
  %548 = vmatprep.subr.bf16.mxu0 0
  %549 = vmatpush1.bf16.msra.mxu0 0
  %550 = vmatprep.subr.bf16.mxu0 0
  %551 = vmatpush1.bf16.msra.mxu0 0
  %552 = vmatprep.subr.bf16.mxu0 0
  %553 = vmatpush1.bf16.msra.mxu0 0
  %554 = vmatprep.subr.bf16.mxu0 0
  %555 = vmatpush1.bf16.msra.mxu0 0
  %556 = vmatprep.subr.bf16.mxu0 0
  %557 = vmatpush1.bf16.msra.mxu0 0
  %558 = vmatprep.subr.bf16.mxu0 0
  %559 = vmatpush1.bf16.msra.mxu0 0
  %560 = vmatprep.subr.bf16.mxu0 0
  %561 = vmatpush1.bf16.msra.mxu0 0
  %562 = vmatprep.subr.bf16.mxu0 0
  %563 = vmatpush1.bf16.msra.mxu0 0
  %564 = vmatprep.mubr.bf16.mxu0 0
  %565 = vmatmul.mubr.bf16.gmra.mrb[0].mxu0 %v448
  %v566 = vpop.f32.mrb[0].mxu0
  %v567 = vadd.f32 0.0, %v566
  %v568 = vpop.f32.mrb[0].mxu0
  %v569 = vadd.f32 0.0, %v568
  %v570 = vpop.f32.mrb[0].mxu0
  %v571 = vadd.f32 0.0, %v570
  %v572 = vpop.f32.mrb[0].mxu0
  %v573 = vadd.f32 0.0, %v572
  %574 = vmatprep.mubr.bf16.mxu0 0
  %575 = vmatmul.mubr.bf16.gmra.mrb[0].mxu0 %v449
  %v576 = vpop.f32.mrb[0].mxu0
  %v577 = vadd.f32 0.0, %v576
  %v578 = vpop.f32.mrb[0].mxu0
  %v579 = vadd.f32 0.0, %v578
  %v580 = vpop.f32.mrb[0].mxu0
  %v581 = vadd.f32 0.0, %v580
  %v582 = vpop.f32.mrb[0].mxu0
  %v583 = vadd.f32 0.0, %v582
  %584 = vdwg.mxu0
  %v585 = vadd.f32 %v386, %v567
  %v586 = vadd.f32 %v388, %v569
  %v587 = vadd.f32 %v390, %v571
  %v588 = vadd.f32 %v392, %v573
  %v589 = vadd.f32 %v396, %v577
  %v590 = vadd.f32 %v398, %v579
  %v591 = vadd.f32 %v400, %v581
  %v592 = vadd.f32 %v402, %v583
  %v593 = vpack.c.bf16 %v587, %v585
  %v594 = vpack.c.bf16 %v588, %v586
  %v595 = vpack.c.bf16 %v591, %v589
  %v596 = vpack.c.bf16 %v592, %v590
  %v601 = vunpack.c.l.b16 %v593
  %v602 = vunpack.c.l.b16 %v594
  %v603 = vunpack.c.h.b16 %v593
  %v604 = vunpack.c.h.b16 %v594
  %v605 = vunpack.c.l.b16 %v595
  %v606 = vunpack.c.l.b16 %v596
  %v607 = vunpack.c.h.b16 %v595
  %v608 = vunpack.c.h.b16 %v596
  %v609 = vpack.c.b16 %v602, %v601
  %v610 = vpack.c.b16 %v604, %v603
  %v611 = vpack.c.b16 %v606, %v605
  %v612 = vpack.c.b16 %v608, %v607
  %vm613 = vsmask.f32 256
  %vm614 = vsmask.f32 4368
  %vm615 = vmor %vm613, %vm614
  %v617 = vshrl.u32 %v609, 16
  %v619 = vrot.slane %v617, 7
  %v620 = vshll.u32 %v609, 16
  %v622 = vor.u32 %v619, %v620
  %v623 = vrot.slane %v619, 4
  %v625 = vshrl.u32 %v610, 16
  %v627 = vrot.slane %v625, 7
  %v628 = vshll.u32 %v610, 16
  %v630 = vor.u32 %v627, %v628
  %v631 = vsel %vm615, %v623, %v630
  %v632 = vrot.slane %v627, 4
  %v634 = vshrl.u32 %v611, 16
  %v636 = vrot.slane %v634, 7
  %v637 = vshll.u32 %v611, 16
  %v639 = vor.u32 %v636, %v637
  %v640 = vrot.slane %v636, 4
  %v642 = vshrl.u32 %v612, 16
  %v644 = vrot.slane %v642, 7
  %v645 = vshll.u32 %v612, 16
  %v647 = vor.u32 %v644, %v645
  %v648 = vsel %vm615, %v640, %v647
  %v649 = vrot.slane %v644, 4
  %vm656 = vcmask 1043456
  %vm657 = vsmask.f32 7938
  %vm658 = vmand %vm656, %vm657
  %vm659 = vcmask 1047556
  %vm660 = vsmask.f32 7954
  %vm661 = vmand %vm659, %vm660
  %vm662 = vmor %vm661, %vm658
  %v663 = vld [vmem:[#allocation2] sm:$0xff]
  %v664 = vsel %vm662, %v622, %v663
  %665 = vst [vmem:[#allocation2] sm:$0xff] %v664
  %666 = vst [vmem:[#allocation2 + $0x8] sm:$0xff] %v631
  %vm667 = vcmask 1040384
  %vm668 = vmand %vm667, %vm613
  %vm669 = vcmask 1044484
  %vm670 = vsmask.f32 4352
  %vm671 = vmand %vm669, %vm670
  %vm672 = vmor %vm671, %vm668
  %v673 = vld [vmem:[#allocation2 + $0x10] sm:$0x11]
  %v674 = vsel %vm672, %v632, %v673
  %675 = vst [vmem:[#allocation2 + $0x10] sm:$0x11] %v674
  %v676 = vld [vmem:[#allocation2 + $0x18] sm:$0xff]
  %v677 = vsel %vm662, %v639, %v676
  %678 = vst [vmem:[#allocation2 + $0x18] sm:$0xff] %v677
  %679 = vst [vmem:[#allocation2 + $0x20] sm:$0xff] %v648
  %v680 = vld [vmem:[#allocation2 + $0x28] sm:$0x11]
  %v681 = vsel %vm672, %v649, %v680
  %682 = vst [vmem:[#allocation2 + $0x28] sm:$0x11] %v681
  %v683 = vld [vmem:[#allocation2] sm:$0xff]
  %v684 = vld [vmem:[#allocation2 + $0x8] sm:$0xff]
  %v685 = vld [vmem:[#allocation2 + $0x18] sm:$0xff]
  %v686 = vld [vmem:[#allocation2 + $0x20] sm:$0xff]
  %v687 = vld [vmem:[%s2] sm:$0xff]
  %v688 = vld [vmem:[%s2 + $0x8] sm:$0xff]
  %v689 = vld [vmem:[%s2 + $0x10] sm:$0xff]
  %v690 = vld [vmem:[%s2 + $0x18] sm:$0xff]
  %v691 = vld [vmem:[%s2 + $0x20] sm:$0xff]
  %v692 = vld [vmem:[%s2 + $0x28] sm:$0xff]
  %v693 = vld [vmem:[%s2 + $0x30] sm:$0xff]
  %v694 = vld [vmem:[%s2 + $0x38] sm:$0xff]
  %v695 = vld [vmem:[%s2 + $0x40] sm:$0xff]
  %v696 = vld [vmem:[%s2 + $0x48] sm:$0xff]
  %v697 = vld [vmem:[%s2 + $0x50] sm:$0xff]
  %v698 = vld [vmem:[%s2 + $0x58] sm:$0xff]
  %v699 = vld [vmem:[%s2 + $0x60] sm:$0xff]
  %v700 = vld [vmem:[%s2 + $0x68] sm:$0xff]
  %v701 = vld [vmem:[%s2 + $0x70] sm:$0xff]
  %v702 = vld [vmem:[%s2 + $0x78] sm:$0xff]
  %v703 = vld [vmem:[%s2 + $0x80] sm:$0xff]
  %v704 = vld [vmem:[%s2 + $0x88] sm:$0xff]
  %v705 = vld [vmem:[%s2 + $0x90] sm:$0xff]
  %v706 = vld [vmem:[%s2 + $0x98] sm:$0xff]
  %v707 = vld [vmem:[%s2 + $0xa0] sm:$0xff]
  %v708 = vld [vmem:[%s2 + $0xa8] sm:$0xff]
  %v709 = vld [vmem:[%s2 + $0xb0] sm:$0xff]
  %v710 = vld [vmem:[%s2 + $0xb8] sm:$0xff]
  %v711 = vld [vmem:[%s2 + $0xc0] sm:$0xff]
  %v712 = vld [vmem:[%s2 + $0xc8] sm:$0xff]
  %v713 = vld [vmem:[%s2 + $0xd0] sm:$0xff]
  %v714 = vld [vmem:[%s2 + $0xd8] sm:$0xff]
  %v715 = vld [vmem:[%s2 + $0xe0] sm:$0xff]
  %v716 = vld [vmem:[%s2 + $0xe8] sm:$0xff]
  %v717 = vld [vmem:[%s2 + $0xf0] sm:$0xff]
  %v718 = vld [vmem:[%s2 + $0xf8] sm:$0xff]
  %v719 = vld [vmem:[#allocation2 + $0x10] sm:$0x11]
  %v720 = vld [vmem:[#allocation2 + $0x28] sm:$0x11]
  %v722 = vshrl.u32 %v683, 16
  %v724 = vrot.slane %v722, 4
  %v725 = vshll.u32 %v683, 16
  %v727 = vrot.slane %v725, 5
  %v728 = vor.u32 %v724, %v727
  %v729 = vrot.slane %v728, 4
  %v731 = vshll.u32 %v684, 16
  %v733 = vrot.slane %v731, 5
  %v734 = vsel %vm52, %v729, %v733
  %v735 = vshrl.u32 %v684, 16
  %v737 = vrot.slane %v735, 4
  %v738 = vor.u32 %v737, %v733
  %v739 = vrot.slane %v738, 4
  %v741 = vshll.u32 %v719, 16
  %v743 = vrot.slane %v741, 5
  %v744 = vsel %vm52, %v739, %v743
  %v746 = vshrl.u32 %v685, 16
  %v748 = vrot.slane %v746, 4
  %v749 = vshll.u32 %v685, 16
  %v751 = vrot.slane %v749, 5
  %v752 = vor.u32 %v748, %v751
  %v753 = vrot.slane %v752, 4
  %v755 = vshll.u32 %v686, 16
  %v757 = vrot.slane %v755, 5
  %v758 = vsel %vm52, %v753, %v757
  %v759 = vshrl.u32 %v686, 16
  %v761 = vrot.slane %v759, 4
  %v762 = vor.u32 %v761, %v757
  %v763 = vrot.slane %v762, 4
  %v765 = vshll.u32 %v720, 16
  %v767 = vrot.slane %v765, 5
  %v768 = vsel %vm52, %v763, %v767
  %s769 = scalar_lea.vmem %s2, 256
  %v770 = vld [vmem:[%s769] sm:$0xff]
  %v771 = vld [vmem:[%s769 + $0x8] sm:$0xff]
  %v772 = vld [vmem:[%s769 + $0x10] sm:$0xff]
  %v773 = vld [vmem:[%s769 + $0x18] sm:$0xff]
  %v774 = vld [vmem:[%s769 + $0x20] sm:$0xff]
  %v775 = vld [vmem:[%s769 + $0x28] sm:$0xff]
  %v776 = vld [vmem:[%s769 + $0x30] sm:$0xff]
  %v777 = vld [vmem:[%s769 + $0x38] sm:$0xff]
  %v778 = vld [vmem:[%s769 + $0x40] sm:$0xff]
  %v779 = vld [vmem:[%s769 + $0x48] sm:$0xff]
  %v780 = vld [vmem:[%s769 + $0x50] sm:$0xff]
  %v781 = vld [vmem:[%s769 + $0x58] sm:$0xff]
  %v782 = vld [vmem:[%s769 + $0x60] sm:$0xff]
  %v783 = vld [vmem:[%s769 + $0x68] sm:$0xff]
  %v784 = vld [vmem:[%s769 + $0x70] sm:$0xff]
  %v785 = vld [vmem:[%s769 + $0x78] sm:$0xff]
  %v786 = vld [vmem:[%s769 + $0x80] sm:$0xff]
  %v787 = vld [vmem:[%s769 + $0x88] sm:$0xff]
  %v788 = vld [vmem:[%s769 + $0x90] sm:$0xff]
  %v789 = vld [vmem:[%s769 + $0x98] sm:$0xff]
  %v790 = vld [vmem:[%s769 + $0xa0] sm:$0xff]
  %v791 = vld [vmem:[%s769 + $0xa8] sm:$0xff]
  %v792 = vld [vmem:[%s769 + $0xb0] sm:$0xff]
  %v793 = vld [vmem:[%s769 + $0xb8] sm:$0xff]
  %v794 = vld [vmem:[%s769 + $0xc0] sm:$0xff]
  %v795 = vld [vmem:[%s769 + $0xc8] sm:$0xff]
  %v796 = vld [vmem:[%s769 + $0xd0] sm:$0xff]
  %v797 = vld [vmem:[%s769 + $0xd8] sm:$0xff]
  %v798 = vld [vmem:[%s769 + $0xe0] sm:$0xff]
  %v799 = vld [vmem:[%s769 + $0xe8] sm:$0xff]
  %v800 = vld [vmem:[%s769 + $0xf0] sm:$0xff]
  %v801 = vld [vmem:[%s769 + $0xf8] sm:$0xff]
  %v802 = vunpack.c.l.b16 %v734
  %v803 = vunpack.c.h.b16 %v734
  %v804 = vunpack.c.l.b16 %v744
  %v805 = vunpack.c.h.b16 %v744
  %v806 = vunpack.c.l.b16 %v758
  %v807 = vunpack.c.h.b16 %v758
  %v808 = vunpack.c.l.b16 %v768
  %v809 = vunpack.c.h.b16 %v768
  %v810 = vpack.c.b16 %v804, %v802
  %v811 = vpack.c.b16 %v805, %v803
  %v812 = vpack.c.b16 %v808, %v806
  %v813 = vpack.c.b16 %v809, %v807
  %v850 = vunpack.c.l.b16 %v770
  %v851 = vunpack.c.h.b16 %v770
  %v852 = vunpack.c.l.b16 %v771
  %v853 = vunpack.c.h.b16 %v771
  %v854 = vunpack.c.l.b16 %v772
  %v855 = vunpack.c.h.b16 %v772
  %v856 = vunpack.c.l.b16 %v773
  %v857 = vunpack.c.h.b16 %v773
  %v858 = vunpack.c.l.b16 %v774
  %v859 = vunpack.c.h.b16 %v774
  %v860 = vunpack.c.l.b16 %v775
  %v861 = vunpack.c.h.b16 %v775
  %v862 = vunpack.c.l.b16 %v776
  %v863 = vunpack.c.h.b16 %v776
  %v864 = vunpack.c.l.b16 %v777
  %v865 = vunpack.c.h.b16 %v777
  %v866 = vunpack.c.l.b16 %v778
  %v867 = vunpack.c.h.b16 %v778
  %v868 = vunpack.c.l.b16 %v779
  %v869 = vunpack.c.h.b16 %v779
  %v870 = vunpack.c.l.b16 %v780
  %v871 = vunpack.c.h.b16 %v780
  %v872 = vunpack.c.l.b16 %v781
  %v873 = vunpack.c.h.b16 %v781
  %v874 = vunpack.c.l.b16 %v782
  %v875 = vunpack.c.h.b16 %v782
  %v876 = vunpack.c.l.b16 %v783
  %v877 = vunpack.c.h.b16 %v783
  %v878 = vunpack.c.l.b16 %v784
  %v879 = vunpack.c.h.b16 %v784
  %v880 = vunpack.c.l.b16 %v785
  %v881 = vunpack.c.h.b16 %v785
  %v882 = vunpack.c.l.b16 %v786
  %v883 = vunpack.c.h.b16 %v786
  %v884 = vunpack.c.l.b16 %v787
  %v885 = vunpack.c.h.b16 %v787
  %v886 = vunpack.c.l.b16 %v788
  %v887 = vunpack.c.h.b16 %v788
  %v888 = vunpack.c.l.b16 %v789
  %v889 = vunpack.c.h.b16 %v789
  %v890 = vunpack.c.l.b16 %v790
  %v891 = vunpack.c.h.b16 %v790
  %v892 = vunpack.c.l.b16 %v791
  %v893 = vunpack.c.h.b16 %v791
  %v894 = vunpack.c.l.b16 %v792
  %v895 = vunpack.c.h.b16 %v792
  %v896 = vunpack.c.l.b16 %v793
  %v897 = vunpack.c.h.b16 %v793
  %v898 = vunpack.c.l.b16 %v794
  %v899 = vunpack.c.h.b16 %v794
  %v900 = vunpack.c.l.b16 %v795
  %v901 = vunpack.c.h.b16 %v795
  %v902 = vunpack.c.l.b16 %v796
  %v903 = vunpack.c.h.b16 %v796
  %v904 = vunpack.c.l.b16 %v797
  %v905 = vunpack.c.h.b16 %v797
  %v906 = vunpack.c.l.b16 %v798
  %v907 = vunpack.c.h.b16 %v798
  %v908 = vunpack.c.l.b16 %v799
  %v909 = vunpack.c.h.b16 %v799
  %v910 = vunpack.c.l.b16 %v800
  %v911 = vunpack.c.h.b16 %v800
  %v912 = vunpack.c.l.b16 %v801
  %v913 = vunpack.c.h.b16 %v801
  %v914 = vpack.c.b16 %v852, %v850
  %v915 = vpack.c.b16 %v853, %v851
  %v916 = vpack.c.b16 %v856, %v854
  %v917 = vpack.c.b16 %v857, %v855
  %v918 = vpack.c.b16 %v860, %v858
  %v919 = vpack.c.b16 %v861, %v859
  %v920 = vpack.c.b16 %v864, %v862
  %v921 = vpack.c.b16 %v865, %v863
  %v922 = vpack.c.b16 %v868, %v866
  %v923 = vpack.c.b16 %v869, %v867
  %v924 = vpack.c.b16 %v872, %v870
  %v925 = vpack.c.b16 %v873, %v871
  %v926 = vpack.c.b16 %v876, %v874
  %v927 = vpack.c.b16 %v877, %v875
  %v928 = vpack.c.b16 %v880, %v878
  %v929 = vpack.c.b16 %v881, %v879
  %v930 = vpack.c.b16 %v884, %v882
  %v931 = vpack.c.b16 %v885, %v883
  %v932 = vpack.c.b16 %v888, %v886
  %v933 = vpack.c.b16 %v889, %v887
  %v934 = vpack.c.b16 %v892, %v890
  %v935 = vpack.c.b16 %v893, %v891
  %v936 = vpack.c.b16 %v896, %v894
  %v937 = vpack.c.b16 %v897, %v895
  %v938 = vpack.c.b16 %v900, %v898
  %v939 = vpack.c.b16 %v901, %v899
  %v940 = vpack.c.b16 %v904, %v902
  %v941 = vpack.c.b16 %v905, %v903
  %v942 = vpack.c.b16 %v908, %v906
  %v943 = vpack.c.b16 %v909, %v907
  %v944 = vpack.c.b16 %v912, %v910
  %v945 = vpack.c.b16 %v913, %v911
  %978 = vmatprep.subr.bf16.mxu0 %v915
  %979 = vmatpush1.bf16.msra.mxu0 %v914
  %980 = vmatprep.subr.bf16.mxu0 %v917
  %981 = vmatpush1.bf16.msra.mxu0 %v916
  %982 = vmatprep.subr.bf16.mxu0 %v919
  %983 = vmatpush1.bf16.msra.mxu0 %v918
  %984 = vmatprep.subr.bf16.mxu0 %v921
  %985 = vmatpush1.bf16.msra.mxu0 %v920
  %986 = vmatprep.subr.bf16.mxu0 %v923
  %987 = vmatpush1.bf16.msra.mxu0 %v922
  %988 = vmatprep.subr.bf16.mxu0 %v925
  %989 = vmatpush1.bf16.msra.mxu0 %v924
  %990 = vmatprep.subr.bf16.mxu0 %v927
  %991 = vmatpush1.bf16.msra.mxu0 %v926
  %992 = vmatprep.subr.bf16.mxu0 %v929
  %993 = vmatpush1.bf16.msra.mxu0 %v928
  %994 = vmatprep.subr.bf16.mxu0 %v931
  %995 = vmatpush1.bf16.msra.mxu0 %v930
  %996 = vmatprep.subr.bf16.mxu0 %v933
  %997 = vmatpush1.bf16.msra.mxu0 %v932
  %998 = vmatprep.subr.bf16.mxu0 %v935
  %999 = vmatpush1.bf16.msra.mxu0 %v934
  %1000 = vmatprep.subr.bf16.mxu0 %v937
  %1001 = vmatpush1.bf16.msra.mxu0 %v936
  %1002 = vmatprep.subr.bf16.mxu0 %v939
  %1003 = vmatpush1.bf16.msra.mxu0 %v938
  %1004 = vmatprep.subr.bf16.mxu0 %v941
  %1005 = vmatpush1.bf16.msra.mxu0 %v940
  %1006 = vmatprep.subr.bf16.mxu0 %v943
  %1007 = vmatpush1.bf16.msra.mxu0 %v942
  %1008 = vmatprep.subr.bf16.mxu0 %v945
  %1009 = vmatpush1.bf16.msra.mxu0 %v944
  %1010 = vmatprep.mubr.bf16.mxu0 %v811
  %1011 = vmatmul.mubr.bf16.gmra.mrb[0].mxu0 %v810
  %v1012 = vpop.f32.mrb[0].mxu0
  %v1013 = vadd.f32 0.0, %v1012
  %v1014 = vpop.f32.mrb[0].mxu0
  %v1015 = vadd.f32 0.0, %v1014
  %v1016 = vpop.f32.mrb[0].mxu0
  %v1017 = vadd.f32 0.0, %v1016
  %v1018 = vpop.f32.mrb[0].mxu0
  %v1019 = vadd.f32 0.0, %v1018
  %1020 = vmatprep.mubr.bf16.mxu0 %v813
  %1021 = vmatmul.mubr.bf16.gmra.mrb[0].mxu0 %v812
  %v1022 = vpop.f32.mrb[0].mxu0
  %v1023 = vadd.f32 0.0, %v1022
  %v1024 = vpop.f32.mrb[0].mxu0
  %v1025 = vadd.f32 0.0, %v1024
  %v1026 = vpop.f32.mrb[0].mxu0
  %v1027 = vadd.f32 0.0, %v1026
  %v1028 = vpop.f32.mrb[0].mxu0
  %v1029 = vadd.f32 0.0, %v1028
  %1030 = vdwg.mxu0
  %v1035 = vunpack.c.l.b16 %v683
  %v1036 = vunpack.c.h.b16 %v683
  %v1037 = vunpack.c.l.b16 %v684
  %v1038 = vunpack.c.h.b16 %v684
  %v1039 = vunpack.c.l.b16 %v685
  %v1040 = vunpack.c.h.b16 %v685
  %v1041 = vunpack.c.l.b16 %v686
  %v1042 = vunpack.c.h.b16 %v686
  %v1043 = vpack.c.b16 %v1037, %v1035
  %v1044 = vpack.c.b16 %v1038, %v1036
  %v1045 = vpack.c.b16 %v1041, %v1039
  %v1046 = vpack.c.b16 %v1042, %v1040
  %v1083 = vunpack.c.l.b16 %v687
  %v1084 = vunpack.c.h.b16 %v687
  %v1085 = vunpack.c.l.b16 %v688
  %v1086 = vunpack.c.h.b16 %v688
  %v1087 = vunpack.c.l.b16 %v689
  %v1088 = vunpack.c.h.b16 %v689
  %v1089 = vunpack.c.l.b16 %v690
  %v1090 = vunpack.c.h.b16 %v690
  %v1091 = vunpack.c.l.b16 %v691
  %v1092 = vunpack.c.h.b16 %v691
  %v1093 = vunpack.c.l.b16 %v692
  %v1094 = vunpack.c.h.b16 %v692
  %v1095 = vunpack.c.l.b16 %v693
  %v1096 = vunpack.c.h.b16 %v693
  %v1097 = vunpack.c.l.b16 %v694
  %v1098 = vunpack.c.h.b16 %v694
  %v1099 = vunpack.c.l.b16 %v695
  %v1100 = vunpack.c.h.b16 %v695
  %v1101 = vunpack.c.l.b16 %v696
  %v1102 = vunpack.c.h.b16 %v696
  %v1103 = vunpack.c.l.b16 %v697
  %v1104 = vunpack.c.h.b16 %v697
  %v1105 = vunpack.c.l.b16 %v698
  %v1106 = vunpack.c.h.b16 %v698
  %v1107 = vunpack.c.l.b16 %v699
  %v1108 = vunpack.c.h.b16 %v699
  %v1109 = vunpack.c.l.b16 %v700
  %v1110 = vunpack.c.h.b16 %v700
  %v1111 = vunpack.c.l.b16 %v701
  %v1112 = vunpack.c.h.b16 %v701
  %v1113 = vunpack.c.l.b16 %v702
  %v1114 = vunpack.c.h.b16 %v702
  %v1115 = vunpack.c.l.b16 %v703
  %v1116 = vunpack.c.h.b16 %v703
  %v1117 = vunpack.c.l.b16 %v704
  %v1118 = vunpack.c.h.b16 %v704
  %v1119 = vunpack.c.l.b16 %v705
  %v1120 = vunpack.c.h.b16 %v705
  %v1121 = vunpack.c.l.b16 %v706
  %v1122 = vunpack.c.h.b16 %v706
  %v1123 = vunpack.c.l.b16 %v707
  %v1124 = vunpack.c.h.b16 %v707
  %v1125 = vunpack.c.l.b16 %v708
  %v1126 = vunpack.c.h.b16 %v708
  %v1127 = vunpack.c.l.b16 %v709
  %v1128 = vunpack.c.h.b16 %v709
  %v1129 = vunpack.c.l.b16 %v710
  %v1130 = vunpack.c.h.b16 %v710
  %v1131 = vunpack.c.l.b16 %v711
  %v1132 = vunpack.c.h.b16 %v711
  %v1133 = vunpack.c.l.b16 %v712
  %v1134 = vunpack.c.h.b16 %v712
  %v1135 = vunpack.c.l.b16 %v713
  %v1136 = vunpack.c.h.b16 %v713
  %v1137 = vunpack.c.l.b16 %v714
  %v1138 = vunpack.c.h.b16 %v714
  %v1139 = vunpack.c.l.b16 %v715
  %v1140 = vunpack.c.h.b16 %v715
  %v1141 = vunpack.c.l.b16 %v716
  %v1142 = vunpack.c.h.b16 %v716
  %v1143 = vunpack.c.l.b16 %v717
  %v1144 = vunpack.c.h.b16 %v717
  %v1145 = vunpack.c.l.b16 %v718
  %v1146 = vunpack.c.h.b16 %v718
  %v1147 = vpack.c.b16 %v1085, %v1083
  %v1148 = vpack.c.b16 %v1086, %v1084
  %v1149 = vpack.c.b16 %v1089, %v1087
  %v1150 = vpack.c.b16 %v1090, %v1088
  %v1151 = vpack.c.b16 %v1093, %v1091
  %v1152 = vpack.c.b16 %v1094, %v1092
  %v1153 = vpack.c.b16 %v1097, %v1095
  %v1154 = vpack.c.b16 %v1098, %v1096
  %v1155 = vpack.c.b16 %v1101, %v1099
  %v1156 = vpack.c.b16 %v1102, %v1100
  %v1157 = vpack.c.b16 %v1105, %v1103
  %v1158 = vpack.c.b16 %v1106, %v1104
  %v1159 = vpack.c.b16 %v1109, %v1107
  %v1160 = vpack.c.b16 %v1110, %v1108
  %v1161 = vpack.c.b16 %v1113, %v1111
  %v1162 = vpack.c.b16 %v1114, %v1112
  %v1163 = vpack.c.b16 %v1117, %v1115
  %v1164 = vpack.c.b16 %v1118, %v1116
  %v1165 = vpack.c.b16 %v1121, %v1119
  %v1166 = vpack.c.b16 %v1122, %v1120
  %v1167 = vpack.c.b16 %v1125, %v1123
  %v1168 = vpack.c.b16 %v1126, %v1124
  %v1169 = vpack.c.b16 %v1129, %v1127
  %v1170 = vpack.c.b16 %v1130, %v1128
  %v1171 = vpack.c.b16 %v1133, %v1131
  %v1172 = vpack.c.b16 %v1134, %v1132
  %v1173 = vpack.c.b16 %v1137, %v1135
  %v1174 = vpack.c.b16 %v1138, %v1136
  %v1175 = vpack.c.b16 %v1141, %v1139
  %v1176 = vpack.c.b16 %v1142, %v1140
  %v1177 = vpack.c.b16 %v1145, %v1143
  %v1178 = vpack.c.b16 %v1146, %v1144
  %1211 = vmatprep.subr.bf16.mxu0 %v1148
  %1212 = vmatpush1.bf16.msra.mxu0 %v1147
  %1213 = vmatprep.subr.bf16.mxu0 %v1150
  %1214 = vmatpush1.bf16.msra.mxu0 %v1149
  %1215 = vmatprep.subr.bf16.mxu0 %v1152
  %1216 = vmatpush1.bf16.msra.mxu0 %v1151
  %1217 = vmatprep.subr.bf16.mxu0 %v1154
  %1218 = vmatpush1.bf16.msra.mxu0 %v1153
  %1219 = vmatprep.subr.bf16.mxu0 %v1156
  %1220 = vmatpush1.bf16.msra.mxu0 %v1155
  %1221 = vmatprep.subr.bf16.mxu0 %v1158
  %1222 = vmatpush1.bf16.msra.mxu0 %v1157
  %1223 = vmatprep.subr.bf16.mxu0 %v1160
  %1224 = vmatpush1.bf16.msra.mxu0 %v1159
  %1225 = vmatprep.subr.bf16.mxu0 %v1162
  %1226 = vmatpush1.bf16.msra.mxu0 %v1161
  %1227 = vmatprep.subr.bf16.mxu0 %v1164
  %1228 = vmatpush1.bf16.msra.mxu0 %v1163
  %1229 = vmatprep.subr.bf16.mxu0 %v1166
  %1230 = vmatpush1.bf16.msra.mxu0 %v1165
  %1231 = vmatprep.subr.bf16.mxu0 %v1168
  %1232 = vmatpush1.bf16.msra.mxu0 %v1167
  %1233 = vmatprep.subr.bf16.mxu0 %v1170
  %1234 = vmatpush1.bf16.msra.mxu0 %v1169
  %1235 = vmatprep.subr.bf16.mxu0 %v1172
  %1236 = vmatpush1.bf16.msra.mxu0 %v1171
  %1237 = vmatprep.subr.bf16.mxu0 %v1174
  %1238 = vmatpush1.bf16.msra.mxu0 %v1173
  %1239 = vmatprep.subr.bf16.mxu0 %v1176
  %1240 = vmatpush1.bf16.msra.mxu0 %v1175
  %1241 = vmatprep.subr.bf16.mxu0 %v1178
  %1242 = vmatpush1.bf16.msra.mxu0 %v1177
  %1243 = vmatprep.mubr.bf16.mxu0 %v1044
  %1244 = vmatmul.mubr.bf16.gmra.mrb[0].mxu0 %v1043
  %v1245 = vpop.f32.mrb[0].mxu0
  %v1246 = vadd.f32 %v1013, %v1245
  %v1247 = vpop.f32.mrb[0].mxu0
  %v1248 = vadd.f32 %v1015, %v1247
  %v1249 = vpop.f32.mrb[0].mxu0
  %v1250 = vadd.f32 %v1017, %v1249
  %v1251 = vpop.f32.mrb[0].mxu0
  %v1252 = vadd.f32 %v1019, %v1251
  %1253 = vmatprep.mubr.bf16.mxu0 %v1046
  %1254 = vmatmul.mubr.bf16.gmra.mrb[0].mxu0 %v1045
  %v1255 = vpop.f32.mrb[0].mxu0
  %v1256 = vadd.f32 %v1023, %v1255
  %v1257 = vpop.f32.mrb[0].mxu0
  %v1258 = vadd.f32 %v1025, %v1257
  %v1259 = vpop.f32.mrb[0].mxu0
  %v1260 = vadd.f32 %v1027, %v1259
  %v1261 = vpop.f32.mrb[0].mxu0
  %v1262 = vadd.f32 %v1029, %v1261
  %1263 = vdwg.mxu0
  %v1264 = vld [vmem:[#allocation2] sm:$0xee]
  %v1265 = vld [vmem:[#allocation2 + $0x18] sm:$0xee]
  %v1270 = vrot.slane %v1264, 5
  %v1271 = vrot.slane %v1270, 4
  %v1272 = vrot.slane %v684, 5
  %v1273 = vsel %vm412, %v1271, %v1272
  %v1274 = vrot.slane %v1272, 4
  %v1275 = vrot.slane %v719, 5
  %v1276 = vsel %vm412, %v1274, %v1275
  %v1277 = vrot.slane %v1265, 5
  %v1278 = vrot.slane %v1277, 4
  %v1279 = vrot.slane %v686, 5
  %v1280 = vsel %vm412, %v1278, %v1279
  %v1281 = vrot.slane %v1279, 4
  %v1282 = vrot.slane %v720, 5
  %v1283 = vsel %vm412, %v1281, %v1282
  %s1284 = scalar_lea.vmem %s2, 512
  %v1285 = vld [vmem:[%s1284] sm:$0xff]
  %v1286 = vld [vmem:[%s1284 + $0x8] sm:$0xff]
  %v1287 = vld [vmem:[%s1284 + $0x10] sm:$0xff]
  %v1288 = vld [vmem:[%s1284 + $0x18] sm:$0xff]
  %v1289 = vld [vmem:[%s1284 + $0x20] sm:$0xff]
  %v1290 = vld [vmem:[%s1284 + $0x28] sm:$0xff]
  %v1291 = vld [vmem:[%s1284 + $0x30] sm:$0xff]
  %v1292 = vld [vmem:[%s1284 + $0x38] sm:$0xff]
  %v1293 = vld [vmem:[%s1284 + $0x40] sm:$0xff]
  %v1294 = vld [vmem:[%s1284 + $0x48] sm:$0xff]
  %v1295 = vld [vmem:[%s1284 + $0x50] sm:$0xff]
  %v1296 = vld [vmem:[%s1284 + $0x58] sm:$0xff]
  %v1297 = vld [vmem:[%s1284 + $0x60] sm:$0xff]
  %v1298 = vld [vmem:[%s1284 + $0x68] sm:$0xff]
  %v1299 = vld [vmem:[%s1284 + $0x70] sm:$0xff]
  %v1300 = vld [vmem:[%s1284 + $0x78] sm:$0xff]
  %v1301 = vld [vmem:[%s1284 + $0x80] sm:$0xff]
  %v1302 = vld [vmem:[%s1284 + $0x88] sm:$0xff]
  %v1303 = vld [vmem:[%s1284 + $0x90] sm:$0xff]
  %v1304 = vld [vmem:[%s1284 + $0x98] sm:$0xff]
  %v1305 = vld [vmem:[%s1284 + $0xa0] sm:$0xff]
  %v1306 = vld [vmem:[%s1284 + $0xa8] sm:$0xff]
  %v1307 = vld [vmem:[%s1284 + $0xb0] sm:$0xff]
  %v1308 = vld [vmem:[%s1284 + $0xb8] sm:$0xff]
  %v1309 = vld [vmem:[%s1284 + $0xc0] sm:$0xff]
  %v1310 = vld [vmem:[%s1284 + $0xc8] sm:$0xff]
  %v1311 = vld [vmem:[%s1284 + $0xd0] sm:$0xff]
  %v1312 = vld [vmem:[%s1284 + $0xd8] sm:$0xff]
  %v1313 = vld [vmem:[%s1284 + $0xe0] sm:$0xff]
  %v1314 = vld [vmem:[%s1284 + $0xe8] sm:$0xff]
  %v1315 = vld [vmem:[%s1284 + $0xf0] sm:$0xff]
  %v1316 = vld [vmem:[%s1284 + $0xf8] sm:$0xff]
  %v1317 = vunpack.c.l.b16 %v1273
  %v1318 = vunpack.c.h.b16 %v1273
  %v1319 = vunpack.c.l.b16 %v1276
  %v1320 = vunpack.c.h.b16 %v1276
  %v1321 = vunpack.c.l.b16 %v1280
  %v1322 = vunpack.c.h.b16 %v1280
  %v1323 = vunpack.c.l.b16 %v1283
  %v1324 = vunpack.c.h.b16 %v1283
  %v1325 = vpack.c.b16 %v1319, %v1317
  %v1326 = vpack.c.b16 %v1320, %v1318
  %v1327 = vpack.c.b16 %v1323, %v1321
  %v1328 = vpack.c.b16 %v1324, %v1322
  %v1365 = vunpack.c.l.b16 %v1285
  %v1366 = vunpack.c.h.b16 %v1285
  %v1367 = vunpack.c.l.b16 %v1286
  %v1368 = vunpack.c.h.b16 %v1286
  %v1369 = vunpack.c.l.b16 %v1287
  %v1370 = vunpack.c.h.b16 %v1287
  %v1371 = vunpack.c.l.b16 %v1288
  %v1372 = vunpack.c.h.b16 %v1288
  %v1373 = vunpack.c.l.b16 %v1289
  %v1374 = vunpack.c.h.b16 %v1289
  %v1375 = vunpack.c.l.b16 %v1290
  %v1376 = vunpack.c.h.b16 %v1290
  %v1377 = vunpack.c.l.b16 %v1291
  %v1378 = vunpack.c.h.b16 %v1291
  %v1379 = vunpack.c.l.b16 %v1292
  %v1380 = vunpack.c.h.b16 %v1292
  %v1381 = vunpack.c.l.b16 %v1293
  %v1382 = vunpack.c.h.b16 %v1293
  %v1383 = vunpack.c.l.b16 %v1294
  %v1384 = vunpack.c.h.b16 %v1294
  %v1385 = vunpack.c.l.b16 %v1295
  %v1386 = vunpack.c.h.b16 %v1295
  %v1387 = vunpack.c.l.b16 %v1296
  %v1388 = vunpack.c.h.b16 %v1296
  %v1389 = vunpack.c.l.b16 %v1297
  %v1390 = vunpack.c.h.b16 %v1297
  %v1391 = vunpack.c.l.b16 %v1298
  %v1392 = vunpack.c.h.b16 %v1298
  %v1393 = vunpack.c.l.b16 %v1299
  %v1394 = vunpack.c.h.b16 %v1299
  %v1395 = vunpack.c.l.b16 %v1300
  %v1396 = vunpack.c.h.b16 %v1300
  %v1397 = vunpack.c.l.b16 %v1301
  %v1398 = vunpack.c.h.b16 %v1301
  %v1399 = vunpack.c.l.b16 %v1302
  %v1400 = vunpack.c.h.b16 %v1302
  %v1401 = vunpack.c.l.b16 %v1303
  %v1402 = vunpack.c.h.b16 %v1303
  %v1403 = vunpack.c.l.b16 %v1304
  %v1404 = vunpack.c.h.b16 %v1304
  %v1405 = vunpack.c.l.b16 %v1305
  %v1406 = vunpack.c.h.b16 %v1305
  %v1407 = vunpack.c.l.b16 %v1306
  %v1408 = vunpack.c.h.b16 %v1306
  %v1409 = vunpack.c.l.b16 %v1307
  %v1410 = vunpack.c.h.b16 %v1307
  %v1411 = vunpack.c.l.b16 %v1308
  %v1412 = vunpack.c.h.b16 %v1308
  %v1413 = vunpack.c.l.b16 %v1309
  %v1414 = vunpack.c.h.b16 %v1309
  %v1415 = vunpack.c.l.b16 %v1310
  %v1416 = vunpack.c.h.b16 %v1310
  %v1417 = vunpack.c.l.b16 %v1311
  %v1418 = vunpack.c.h.b16 %v1311
  %v1419 = vunpack.c.l.b16 %v1312
  %v1420 = vunpack.c.h.b16 %v1312
  %v1421 = vunpack.c.l.b16 %v1313
  %v1422 = vunpack.c.h.b16 %v1313
  %v1423 = vunpack.c.l.b16 %v1314
  %v1424 = vunpack.c.h.b16 %v1314
  %v1425 = vunpack.c.l.b16 %v1315
  %v1426 = vunpack.c.h.b16 %v1315
  %v1427 = vunpack.c.l.b16 %v1316
  %v1428 = vunpack.c.h.b16 %v1316
  %v1429 = vpack.c.b16 %v1367, %v1365
  %v1430 = vpack.c.b16 %v1368, %v1366
  %v1431 = vpack.c.b16 %v1371, %v1369
  %v1432 = vpack.c.b16 %v1372, %v1370
  %v1433 = vpack.c.b16 %v1375, %v1373
  %v1434 = vpack.c.b16 %v1376, %v1374
  %v1435 = vpack.c.b16 %v1379, %v1377
  %v1436 = vpack.c.b16 %v1380, %v1378
  %v1437 = vpack.c.b16 %v1383, %v1381
  %v1438 = vpack.c.b16 %v1384, %v1382
  %v1439 = vpack.c.b16 %v1387, %v1385
  %v1440 = vpack.c.b16 %v1388, %v1386
  %v1441 = vpack.c.b16 %v1391, %v1389
  %v1442 = vpack.c.b16 %v1392, %v1390
  %v1443 = vpack.c.b16 %v1395, %v1393
  %v1444 = vpack.c.b16 %v1396, %v1394
  %v1445 = vpack.c.b16 %v1399, %v1397
  %v1446 = vpack.c.b16 %v1400, %v1398
  %v1447 = vpack.c.b16 %v1403, %v1401
  %v1448 = vpack.c.b16 %v1404, %v1402
  %v1449 = vpack.c.b16 %v1407, %v1405
  %v1450 = vpack.c.b16 %v1408, %v1406
  %v1451 = vpack.c.b16 %v1411, %v1409
  %v1452 = vpack.c.b16 %v1412, %v1410
  %v1453 = vpack.c.b16 %v1415, %v1413
  %v1454 = vpack.c.b16 %v1416, %v1414
  %v1455 = vpack.c.b16 %v1419, %v1417
  %v1456 = vpack.c.b16 %v1420, %v1418
  %v1457 = vpack.c.b16 %v1423, %v1421
  %v1458 = vpack.c.b16 %v1424, %v1422
  %v1459 = vpack.c.b16 %v1427, %v1425
  %v1460 = vpack.c.b16 %v1428, %v1426
  %1493 = vmatprep.subr.bf16.mxu0 %v1430
  %1494 = vmatpush1.bf16.msra.mxu0 %v1429
  %1495 = vmatprep.subr.bf16.mxu0 %v1432
  %1496 = vmatpush1.bf16.msra.mxu0 %v1431
  %1497 = vmatprep.subr.bf16.mxu0 %v1434
  %1498 = vmatpush1.bf16.msra.mxu0 %v1433
  %1499 = vmatprep.subr.bf16.mxu0 %v1436
  %1500 = vmatpush1.bf16.msra.mxu0 %v1435
  %1501 = vmatprep.subr.bf16.mxu0 %v1438
  %1502 = vmatpush1.bf16.msra.mxu0 %v1437
  %1503 = vmatprep.subr.bf16.mxu0 %v1440
  %1504 = vmatpush1.bf16.msra.mxu0 %v1439
  %1505 = vmatprep.subr.bf16.mxu0 %v1442
  %1506 = vmatpush1.bf16.msra.mxu0 %v1441
  %1507 = vmatprep.subr.bf16.mxu0 %v1444
  %1508 = vmatpush1.bf16.msra.mxu0 %v1443
  %1509 = vmatprep.subr.bf16.mxu0 %v1446
  %1510 = vmatpush1.bf16.msra.mxu0 %v1445
  %1511 = vmatprep.subr.bf16.mxu0 %v1448
  %1512 = vmatpush1.bf16.msra.mxu0 %v1447
  %1513 = vmatprep.subr.bf16.mxu0 %v1450
  %1514 = vmatpush1.bf16.msra.mxu0 %v1449
  %1515 = vmatprep.subr.bf16.mxu0 %v1452
  %1516 = vmatpush1.bf16.msra.mxu0 %v1451
  %1517 = vmatprep.subr.bf16.mxu0 %v1454
  %1518 = vmatpush1.bf16.msra.mxu0 %v1453
  %1519 = vmatprep.subr.bf16.mxu0 %v1456
  %1520 = vmatpush1.bf16.msra.mxu0 %v1455
  %1521 = vmatprep.subr.bf16.mxu0 %v1458
  %1522 = vmatpush1.bf16.msra.mxu0 %v1457
  %1523 = vmatprep.subr.bf16.mxu0 %v1460
  %1524 = vmatpush1.bf16.msra.mxu0 %v1459
  %1525 = vmatprep.mubr.bf16.mxu0 %v1326
  %1526 = vmatmul.mubr.bf16.gmra.mrb[0].mxu0 %v1325
  %v1527 = vpop.f32.mrb[0].mxu0
  %v1528 = vadd.f32 0.0, %v1527
  %v1529 = vpop.f32.mrb[0].mxu0
  %v1530 = vadd.f32 0.0, %v1529
  %v1531 = vpop.f32.mrb[0].mxu0
  %v1532 = vadd.f32 0.0, %v1531
  %v1533 = vpop.f32.mrb[0].mxu0
  %v1534 = vadd.f32 0.0, %v1533
  %1535 = vmatprep.mubr.bf16.mxu0 %v1328
  %1536 = vmatmul.mubr.bf16.gmra.mrb[0].mxu0 %v1327
  %v1537 = vpop.f32.mrb[0].mxu0
  %v1538 = vadd.f32 0.0, %v1537
  %v1539 = vpop.f32.mrb[0].mxu0
  %v1540 = vadd.f32 0.0, %v1539
  %v1541 = vpop.f32.mrb[0].mxu0
  %v1542 = vadd.f32 0.0, %v1541
  %v1543 = vpop.f32.mrb[0].mxu0
  %v1544 = vadd.f32 0.0, %v1543
  %1545 = vdwg.mxu0
  %v1546 = vadd.f32 %v1246, %v1528
  %v1547 = vadd.f32 %v1248, %v1530
  %v1548 = vadd.f32 %v1250, %v1532
  %v1549 = vadd.f32 %v1252, %v1534
  %v1550 = vadd.f32 %v1256, %v1538
  %v1551 = vadd.f32 %v1258, %v1540
  %v1552 = vadd.f32 %v1260, %v1542
  %v1553 = vadd.f32 %v1262, %v1544
  %v1554 = vmul.f32 %v1546, %v1546
  %v1555 = vmul.f32 %v1548, %v1548
  %v1556 = vmul.f32 %v1550, %v1550
  %v1557 = vmul.f32 %v1552, %v1552
  %v1558 = vmul.f32 %v1547, %v1547
  %v1559 = vmul.f32 %v1549, %v1549
  %v1560 = vmul.f32 %v1551, %v1551
  %v1561 = vmul.f32 %v1553, %v1553
  %v1562 = vadd.f32 %v1554, %v1558
  %v1563 = vadd.f32 %v1555, %v1559
  %v1564 = vadd.f32 %v1556, %v1560
  %v1565 = vadd.f32 %v1557, %v1561
  %1570 = vrot.lane.b32.xlu0 %v1562, 64
  %v1571 = vpop.permute.xlu0 %1570
  %1572 = vrot.lane.b32.xlu0 %v1563, 64
  %v1573 = vpop.permute.xlu0 %1572
  %1574 = vrot.lane.b32.xlu0 %v1564, 64
  %v1575 = vpop.permute.xlu0 %1574
  %1576 = vrot.lane.b32.xlu0 %v1565, 64
  %v1577 = vpop.permute.xlu0 %1576
  %vm1582 = vcmp.gt.f32.partialorder %v1562, %v1571
  %vm1583 = vcmp.gt.f32.partialorder %v1563, %v1573
  %vm1584 = vcmp.gt.f32.partialorder %v1564, %v1575
  %vm1585 = vcmp.gt.f32.partialorder %v1565, %v1577
  %1590 = vrot.lane.b32.xlu0 %v1546, 64
  %v1591 = vpop.permute.xlu0 %1590
  %1592 = vrot.lane.b32.xlu0 %v1548, 64
  %v1593 = vpop.permute.xlu0 %1592
  %1594 = vrot.lane.b32.xlu0 %v1550, 64
  %v1595 = vpop.permute.xlu0 %1594
  %1596 = vrot.lane.b32.xlu0 %v1552, 64
  %v1597 = vpop.permute.xlu0 %1596
  %v1602 = vsel %vm1582, %v1546, %v1591
  %v1603 = vsel %vm1583, %v1548, %v1593
  %v1604 = vsel %vm1584, %v1550, %v1595
  %v1605 = vsel %vm1585, %v1552, %v1597
  %1610 = vrot.lane.b32.xlu0 %v1547, 64
  %v1611 = vpop.permute.xlu0 %1610
  %1612 = vrot.lane.b32.xlu0 %v1549, 64
  %v1613 = vpop.permute.xlu0 %1612
  %1614 = vrot.lane.b32.xlu0 %v1551, 64
  %v1615 = vpop.permute.xlu0 %1614
  %1616 = vrot.lane.b32.xlu0 %v1553, 64
  %v1617 = vpop.permute.xlu0 %1616
  %v1622 = vsel %vm1582, %v1547, %v1611
  %v1623 = vsel %vm1583, %v1549, %v1613
  %v1624 = vsel %vm1584, %v1551, %v1615
  %v1625 = vsel %vm1585, %v1553, %v1617
  %v1626 = vld [vmem:[%s3] sm:$0xff]
  %v1627 = vld [vmem:[%s3 + $0x8] sm:$0xff]
  %s1628 = scalar_lea.vmem %s3, 16
  %v1629 = vld [vmem:[%s1628] sm:$0xff]
  %v1630 = vld [vmem:[%s1628 + $0x8] sm:$0xff]
  %1635 = vrot.lane.b32.xlu0 %v1602, 64
  %v1636 = vpop.permute.xlu0 %1635
  %1637 = vrot.lane.b32.xlu0 %v1603, 64
  %v1638 = vpop.permute.xlu0 %1637
  %1639 = vrot.lane.b32.xlu0 %v1604, 64
  %v1640 = vpop.permute.xlu0 %1639
  %1641 = vrot.lane.b32.xlu0 %v1605, 64
  %v1642 = vpop.permute.xlu0 %1641
  %vm1647 = vcmask 261120
  %v1649 = vsel %vm1647, %v1626, 0
  %v1652 = vsel %vm1647, %v1627, 0
  %1654 = vmatprep.subr.mxu0 0.0
  %1655 = vmatpush1.msra.mxu0 %v1636
  %1656 = vmatprep.subr.mxu0 0.0
  %1657 = vmatpush1.msra.mxu0 %v1638
  %1658 = vmatprep.subr.mxu0 0.0
  %1659 = vmatpush1.msra.mxu0 %v1640
  %1660 = vmatprep.subr.mxu0 0.0
  %1661 = vmatpush1.msra.mxu0 %v1642
  %1662 = vmatprep.subr.mxu0 0.0
  %1663 = vmatpush1.msra.mxu0 0.0
  %1664 = vmatprep.subr.mxu0 0.0
  %1665 = vmatpush1.msra.mxu0 0.0
  %1666 = vmatprep.subr.mxu0 0.0
  %1667 = vmatpush1.msra.mxu0 0.0
  %1668 = vmatprep.subr.mxu0 0.0
  %1669 = vmatpush1.msra.mxu0 0.0
  %1670 = vmatprep.subr.mxu0 0.0
  %1671 = vmatpush1.msra.mxu0 0.0
  %1672 = vmatprep.subr.mxu0 0.0
  %1673 = vmatpush1.msra.mxu0 0.0
  %1674 = vmatprep.subr.mxu0 0.0
  %1675 = vmatpush1.msra.mxu0 0.0
  %1676 = vmatprep.subr.mxu0 0.0
  %1677 = vmatpush1.msra.mxu0 0.0
  %1678 = vmatprep.subr.mxu0 0.0
  %1679 = vmatpush1.msra.mxu0 0.0
  %1680 = vmatprep.subr.mxu0 0.0
  %1681 = vmatpush1.msra.mxu0 0.0
  %1682 = vmatprep.subr.mxu0 0.0
  %1683 = vmatpush1.msra.mxu0 0.0
  %1684 = vmatprep.subr.mxu0 0.0
  %1685 = vmatpush1.msra.mxu0 0.0
  %1686 = vmatprep.subr.mxu0 0.0
  %1687 = vmatpush1.msra.mxu0 0.0
  %1688 = vmatprep.subr.mxu0 0.0
  %1689 = vmatpush1.msra.mxu0 0.0
  %1690 = vmatprep.subr.mxu0 0.0
  %1691 = vmatpush1.msra.mxu0 0.0
  %1692 = vmatprep.subr.mxu0 0.0
  %1693 = vmatpush1.msra.mxu0 0.0
  %1694 = vmatprep.subr.mxu0 0.0
  %1695 = vmatpush1.msra.mxu0 0.0
  %1696 = vmatprep.subr.mxu0 0.0
  %1697 = vmatpush1.msra.mxu0 0.0
  %1698 = vmatprep.subr.mxu0 0.0
  %1699 = vmatpush1.msra.mxu0 0.0
  %1700 = vmatprep.subr.mxu0 0.0
  %1701 = vmatpush1.msra.mxu0 0.0
  %1702 = vmatprep.subr.mxu0 0.0
  %1703 = vmatpush1.msra.mxu0 0.0
  %1704 = vmatprep.subr.mxu0 0.0
  %1705 = vmatpush1.msra.mxu0 0.0
  %1706 = vmatprep.subr.mxu0 0.0
  %1707 = vmatpush1.msra.mxu0 0.0
  %1708 = vmatprep.subr.mxu0 0.0
  %1709 = vmatpush1.msra.mxu0 0.0
  %1710 = vmatprep.subr.mxu0 0.0
  %1711 = vmatpush1.msra.mxu0 0.0
  %1712 = vmatprep.subr.mxu0 0.0
  %1713 = vmatpush1.msra.mxu0 0.0
  %1714 = vmatprep.subr.mxu0 0.0
  %1715 = vmatpush1.msra.mxu0 0.0
  %1716 = vmatprep.subr.mxu0 0.0
  %1717 = vmatpush1.msra.mxu0 0.0
  %1718 = vmatprep.mubr.f32.mxu0 0.0
  %1719 = vmatmul.mubr.f32.gmra.mrb[0].mxu0 %v1649
  %v1720 = vpop.f32.mrb[0].mxu0
  %v1721 = vadd.f32 0.0, %v1720
  %v1722 = vpop.f32.mrb[0].mxu0
  %1723 = vmatprep.mubr.f32.mxu0 0.0
  %1724 = vmatmul.mubr.f32.gmra.mrb[0].mxu0 %v1652
  %v1725 = vpop.f32.mrb[0].mxu0
  %v1726 = vadd.f32 0.0, %v1725
  %v1727 = vpop.f32.mrb[0].mxu0
  %1728 = vdwg.mxu0
  %1733 = vrot.lane.b32.xlu0 %v1622, 64
  %v1734 = vpop.permute.xlu0 %1733
  %1735 = vrot.lane.b32.xlu0 %v1623, 64
  %v1736 = vpop.permute.xlu0 %1735
  %1737 = vrot.lane.b32.xlu0 %v1624, 64
  %v1738 = vpop.permute.xlu0 %1737
  %1739 = vrot.lane.b32.xlu0 %v1625, 64
  %v1740 = vpop.permute.xlu0 %1739
  %1745 = vmatprep.subr.mxu0 0.0
  %1746 = vmatpush1.msra.mxu0 %v1734
  %1747 = vmatprep.subr.mxu0 0.0
  %1748 = vmatpush1.msra.mxu0 %v1736
  %1749 = vmatprep.subr.mxu0 0.0
  %1750 = vmatpush1.msra.mxu0 %v1738
  %1751 = vmatprep.subr.mxu0 0.0
  %1752 = vmatpush1.msra.mxu0 %v1740
  %1753 = vmatprep.subr.mxu0 0.0
  %1754 = vmatpush1.msra.mxu0 0.0
  %1755 = vmatprep.subr.mxu0 0.0
  %1756 = vmatpush1.msra.mxu0 0.0
  %1757 = vmatprep.subr.mxu0 0.0
  %1758 = vmatpush1.msra.mxu0 0.0
  %1759 = vmatprep.subr.mxu0 0.0
  %1760 = vmatpush1.msra.mxu0 0.0
  %1761 = vmatprep.subr.mxu0 0.0
  %1762 = vmatpush1.msra.mxu0 0.0
  %1763 = vmatprep.subr.mxu0 0.0
  %1764 = vmatpush1.msra.mxu0 0.0
  %1765 = vmatprep.subr.mxu0 0.0
  %1766 = vmatpush1.msra.mxu0 0.0
  %1767 = vmatprep.subr.mxu0 0.0
  %1768 = vmatpush1.msra.mxu0 0.0
  %1769 = vmatprep.subr.mxu0 0.0
  %1770 = vmatpush1.msra.mxu0 0.0
  %1771 = vmatprep.subr.mxu0 0.0
  %1772 = vmatpush1.msra.mxu0 0.0
  %1773 = vmatprep.subr.mxu0 0.0
  %1774 = vmatpush1.msra.mxu0 0.0
  %1775 = vmatprep.subr.mxu0 0.0
  %1776 = vmatpush1.msra.mxu0 0.0
  %1777 = vmatprep.subr.mxu0 0.0
  %1778 = vmatpush1.msra.mxu0 0.0
  %1779 = vmatprep.subr.mxu0 0.0
  %1780 = vmatpush1.msra.mxu0 0.0
  %1781 = vmatprep.subr.mxu0 0.0
  %1782 = vmatpush1.msra.mxu0 0.0
  %1783 = vmatprep.subr.mxu0 0.0
  %1784 = vmatpush1.msra.mxu0 0.0
  %1785 = vmatprep.subr.mxu0 0.0
  %1786 = vmatpush1.msra.mxu0 0.0
  %1787 = vmatprep.subr.mxu0 0.0
  %1788 = vmatpush1.msra.mxu0 0.0
  %1789 = vmatprep.subr.mxu0 0.0
  %1790 = vmatpush1.msra.mxu0 0.0
  %1791 = vmatprep.subr.mxu0 0.0
  %1792 = vmatpush1.msra.mxu0 0.0
  %1793 = vmatprep.subr.mxu0 0.0
  %1794 = vmatpush1.msra.mxu0 0.0
  %1795 = vmatprep.subr.mxu0 0.0
  %1796 = vmatpush1.msra.mxu0 0.0
  %1797 = vmatprep.subr.mxu0 0.0
  %1798 = vmatpush1.msra.mxu0 0.0
  %1799 = vmatprep.subr.mxu0 0.0
  %1800 = vmatpush1.msra.mxu0 0.0
  %1801 = vmatprep.subr.mxu0 0.0
  %1802 = vmatpush1.msra.mxu0 0.0
  %1803 = vmatprep.subr.mxu0 0.0
  %1804 = vmatpush1.msra.mxu0 0.0
  %1805 = vmatprep.subr.mxu0 0.0
  %1806 = vmatpush1.msra.mxu0 0.0
  %1807 = vmatprep.subr.mxu0 0.0
  %1808 = vmatpush1.msra.mxu0 0.0
  %1809 = vmatprep.mubr.f32.mxu0 0.0
  %1810 = vmatmul.mubr.f32.gmra.mrb[0].mxu0 %v1649
  %v1811 = vpop.f32.mrb[0].mxu0
  %v1812 = vadd.f32 0.0, %v1811
  %v1813 = vpop.f32.mrb[0].mxu0
  %1814 = vmatprep.mubr.f32.mxu0 0.0
  %1815 = vmatmul.mubr.f32.gmra.mrb[0].mxu0 %v1652
  %v1816 = vpop.f32.mrb[0].mxu0
  %v1817 = vadd.f32 0.0, %v1816
  %v1818 = vpop.f32.mrb[0].mxu0
  %1819 = vdwg.mxu0
  %v1821 = vsel %vm1647, %v1629, 0
  %v1824 = vsel %vm1647, %v1630, 0
  %1826 = vmatprep.subr.mxu0 0.0
  %1827 = vmatpush1.msra.mxu0 %v1636
  %1828 = vmatprep.subr.mxu0 0.0
  %1829 = vmatpush1.msra.mxu0 %v1638
  %1830 = vmatprep.subr.mxu0 0.0
  %1831 = vmatpush1.msra.mxu0 %v1640
  %1832 = vmatprep.subr.mxu0 0.0
  %1833 = vmatpush1.msra.mxu0 %v1642
  %1834 = vmatprep.subr.mxu0 0.0
  %1835 = vmatpush1.msra.mxu0 0.0
  %1836 = vmatprep.subr.mxu0 0.0
  %1837 = vmatpush1.msra.mxu0 0.0
  %1838 = vmatprep.subr.mxu0 0.0
  %1839 = vmatpush1.msra.mxu0 0.0
  %1840 = vmatprep.subr.mxu0 0.0
  %1841 = vmatpush1.msra.mxu0 0.0
  %1842 = vmatprep.subr.mxu0 0.0
  %1843 = vmatpush1.msra.mxu0 0.0
  %1844 = vmatprep.subr.mxu0 0.0
  %1845 = vmatpush1.msra.mxu0 0.0
  %1846 = vmatprep.subr.mxu0 0.0
  %1847 = vmatpush1.msra.mxu0 0.0
  %1848 = vmatprep.subr.mxu0 0.0
  %1849 = vmatpush1.msra.mxu0 0.0
  %1850 = vmatprep.subr.mxu0 0.0
  %1851 = vmatpush1.msra.mxu0 0.0
  %1852 = vmatprep.subr.mxu0 0.0
  %1853 = vmatpush1.msra.mxu0 0.0
  %1854 = vmatprep.subr.mxu0 0.0
  %1855 = vmatpush1.msra.mxu0 0.0
  %1856 = vmatprep.subr.mxu0 0.0
  %1857 = vmatpush1.msra.mxu0 0.0
  %1858 = vmatprep.subr.mxu0 0.0
  %1859 = vmatpush1.msra.mxu0 0.0
  %1860 = vmatprep.subr.mxu0 0.0
  %1861 = vmatpush1.msra.mxu0 0.0
  %1862 = vmatprep.subr.mxu0 0.0
  %1863 = vmatpush1.msra.mxu0 0.0
  %1864 = vmatprep.subr.mxu0 0.0
  %1865 = vmatpush1.msra.mxu0 0.0
  %1866 = vmatprep.subr.mxu0 0.0
  %1867 = vmatpush1.msra.mxu0 0.0
  %1868 = vmatprep.subr.mxu0 0.0
  %1869 = vmatpush1.msra.mxu0 0.0
  %1870 = vmatprep.subr.mxu0 0.0
  %1871 = vmatpush1.msra.mxu0 0.0
  %1872 = vmatprep.subr.mxu0 0.0
  %1873 = vmatpush1.msra.mxu0 0.0
  %1874 = vmatprep.subr.mxu0 0.0
  %1875 = vmatpush1.msra.mxu0 0.0
  %1876 = vmatprep.subr.mxu0 0.0
  %1877 = vmatpush1.msra.mxu0 0.0
  %1878 = vmatprep.subr.mxu0 0.0
  %1879 = vmatpush1.msra.mxu0 0.0
  %1880 = vmatprep.subr.mxu0 0.0
  %1881 = vmatpush1.msra.mxu0 0.0
  %1882 = vmatprep.subr.mxu0 0.0
  %1883 = vmatpush1.msra.mxu0 0.0
  %1884 = vmatprep.subr.mxu0 0.0
  %1885 = vmatpush1.msra.mxu0 0.0
  %1886 = vmatprep.subr.mxu0 0.0
  %1887 = vmatpush1.msra.mxu0 0.0
  %1888 = vmatprep.subr.mxu0 0.0
  %1889 = vmatpush1.msra.mxu0 0.0
  %1890 = vmatprep.mubr.f32.mxu0 0.0
  %1891 = vmatmul.mubr.f32.gmra.mrb[0].mxu0 %v1821
  %v1892 = vpop.f32.mrb[0].mxu0
  %v1893 = vadd.f32 0.0, %v1892
  %v1894 = vpop.f32.mrb[0].mxu0
  %1895 = vmatprep.mubr.f32.mxu0 0.0
  %1896 = vmatmul.mubr.f32.gmra.mrb[0].mxu0 %v1824
  %v1897 = vpop.f32.mrb[0].mxu0
  %v1898 = vadd.f32 0.0, %v1897
  %v1899 = vpop.f32.mrb[0].mxu0
  %1900 = vdwg.mxu0
  %1901 = vmatprep.subr.mxu0 0.0
  %1902 = vmatpush1.msra.mxu0 %v1734
  %1903 = vmatprep.subr.mxu0 0.0
  %1904 = vmatpush1.msra.mxu0 %v1736
  %1905 = vmatprep.subr.mxu0 0.0
  %1906 = vmatpush1.msra.mxu0 %v1738
  %1907 = vmatprep.subr.mxu0 0.0
  %1908 = vmatpush1.msra.mxu0 %v1740
  %1909 = vmatprep.subr.mxu0 0.0
  %1910 = vmatpush1.msra.mxu0 0.0
  %1911 = vmatprep.subr.mxu0 0.0
  %1912 = vmatpush1.msra.mxu0 0.0
  %1913 = vmatprep.subr.mxu0 0.0
  %1914 = vmatpush1.msra.mxu0 0.0
  %1915 = vmatprep.subr.mxu0 0.0
  %1916 = vmatpush1.msra.mxu0 0.0
  %1917 = vmatprep.subr.mxu0 0.0
  %1918 = vmatpush1.msra.mxu0 0.0
  %1919 = vmatprep.subr.mxu0 0.0
  %1920 = vmatpush1.msra.mxu0 0.0
  %1921 = vmatprep.subr.mxu0 0.0
  %1922 = vmatpush1.msra.mxu0 0.0
  %1923 = vmatprep.subr.mxu0 0.0
  %1924 = vmatpush1.msra.mxu0 0.0
  %1925 = vmatprep.subr.mxu0 0.0
  %1926 = vmatpush1.msra.mxu0 0.0
  %1927 = vmatprep.subr.mxu0 0.0
  %1928 = vmatpush1.msra.mxu0 0.0
  %1929 = vmatprep.subr.mxu0 0.0
  %1930 = vmatpush1.msra.mxu0 0.0
  %1931 = vmatprep.subr.mxu0 0.0
  %1932 = vmatpush1.msra.mxu0 0.0
  %1933 = vmatprep.subr.mxu0 0.0
  %1934 = vmatpush1.msra.mxu0 0.0
  %1935 = vmatprep.subr.mxu0 0.0
  %1936 = vmatpush1.msra.mxu0 0.0
  %1937 = vmatprep.subr.mxu0 0.0
  %1938 = vmatpush1.msra.mxu0 0.0
  %1939 = vmatprep.subr.mxu0 0.0
  %1940 = vmatpush1.msra.mxu0 0.0
  %1941 = vmatprep.subr.mxu0 0.0
  %1942 = vmatpush1.msra.mxu0 0.0
  %1943 = vmatprep.subr.mxu0 0.0
  %1944 = vmatpush1.msra.mxu0 0.0
  %1945 = vmatprep.subr.mxu0 0.0
  %1946 = vmatpush1.msra.mxu0 0.0
  %1947 = vmatprep.subr.mxu0 0.0
  %1948 = vmatpush1.msra.mxu0 0.0
  %1949 = vmatprep.subr.mxu0 0.0
  %1950 = vmatpush1.msra.mxu0 0.0
  %1951 = vmatprep.subr.mxu0 0.0
  %1952 = vmatpush1.msra.mxu0 0.0
  %1953 = vmatprep.subr.mxu0 0.0
  %1954 = vmatpush1.msra.mxu0 0.0
  %1955 = vmatprep.subr.mxu0 0.0
  %1956 = vmatpush1.msra.mxu0 0.0
  %1957 = vmatprep.subr.mxu0 0.0
  %1958 = vmatpush1.msra.mxu0 0.0
  %1959 = vmatprep.subr.mxu0 0.0
  %1960 = vmatpush1.msra.mxu0 0.0
  %1961 = vmatprep.subr.mxu0 0.0
  %1962 = vmatpush1.msra.mxu0 0.0
  %1963 = vmatprep.subr.mxu0 0.0
  %1964 = vmatpush1.msra.mxu0 0.0
  %1965 = vmatprep.mubr.f32.mxu0 0.0
  %1966 = vmatmul.mubr.f32.gmra.mrb[0].mxu0 %v1821
  %v1967 = vpop.f32.mrb[0].mxu0
  %v1968 = vadd.f32 0.0, %v1967
  %v1969 = vpop.f32.mrb[0].mxu0
  %1970 = vmatprep.mubr.f32.mxu0 0.0
  %1971 = vmatmul.mubr.f32.gmra.mrb[0].mxu0 %v1824
  %v1972 = vpop.f32.mrb[0].mxu0
  %v1973 = vadd.f32 0.0, %v1972
  %v1974 = vpop.f32.mrb[0].mxu0
  %1975 = vdwg.mxu0
  %v1976 = vmul.f32 %v1893, %v1893
  %v1977 = vmul.f32 %v1898, %v1898
  %v1978 = vmul.f32 %v1968, %v1968
  %v1979 = vmul.f32 %v1973, %v1973
  %v1980 = vadd.f32 %v1976, %v1978
  %v1981 = vadd.f32 %v1977, %v1979
  %v1982 = vmul.f32 %v1721, %v1721
  %v1983 = vmul.f32 %v1726, %v1726
  %v1984 = vmul.f32 %v1812, %v1812
  %v1985 = vmul.f32 %v1817, %v1817
  %v1986 = vadd.f32 %v1982, %v1984
  %v1987 = vadd.f32 %v1983, %v1985
  %vm1988 = vcmp.gt.f32.partialorder %v1980, %v1986
  %vm1989 = vcmp.gt.f32.partialorder %v1981, %v1987
  %v1990 = vsel %vm1988, %v1893, %v1721
  %v1991 = vsel %vm1989, %v1898, %v1726
  %v1992 = vmax.f32 %v1990, 0.0
  %v1993 = vmax.f32 %v1991, 0.0
  %v1994 = vsel %vm1988, %v1968, %v1812
  %v1995 = vsel %vm1989, %v1973, %v1817
  %v1996 = vmax.f32 %v1994, 0.0
  %v1997 = vmax.f32 %v1995, 0.0
  %vm1998 = vcmask 523264
  %1999 = vst.msk [vmem:[%s4] sm:$0xff] %vm1998, %v1992
  %s2000 = scalar_lea.vmem %s4, 8
  %2001 = vst.msk [vmem:[%s2000] sm:$0xff] %vm1998, %v1996
  %s2002 = scalar_lea.vmem %s4, 16
  %2003 = vst.msk [vmem:[%s2002] sm:$0xff] %vm1998, %v1993
  %s2004 = scalar_lea.vmem %s4, 24
  %2005 = vst.msk [vmem:[%s2004] sm:$0xff] %vm1998, %v1997
  // Predicated region
  $region22: #{double_igconv_forward.1} parent=0 // pred_check
    _
  $region23: #{double_igconv_forward.1} parent=0 // pred_check_branch
    %2007 = sbr.rel (0) target = $region25
  $region24: #{double_igconv_forward.1} parent=0 // pred_region
    _
  $region25: #{double_igconv_forward.1} parent=0 // pred_fallthru
    _
  // Predicated region
  $region26: #{double_igconv_forward.1} parent=0 // pred_check
    _
  $region27: #{double_igconv_forward.1} parent=0 // pred_check_branch
    %2009 = sbr.rel (0) target = $region29
  $region28: #{double_igconv_forward.1} parent=0 // pred_region
    _
  $region29: #{double_igconv_forward.1} parent=0 // pred_fallthru
    _

</llo_original>
